<compile_context>
chip_gen: v7x
topology: tpu7x:2x2x1
jax: 0.10.0
libtpu: 0.0.40
codegen_flags: <defaults>
</compile_context>

<pallas_src>
import functools

import jax
import jax.numpy as jnp
from jax.experimental import pallas as pl
from jax.experimental.pallas import tpu as pltpu


def _make_pinn_kernel(bf16_act: bool):
    """bf16_act: cast pre-activations to bf16 for tanh (v6e/v7x opt-in)."""

    def act(v):
        if bf16_act:
            return jnp.tanh(v.astype(jnp.bfloat16)).astype(jnp.float32)
        return jnp.tanh(v)

    def pinn_kernel(x_ref, w1_ref, w2_ref, b2_ref, w3_ref, b3_ref,
                    w4_ref, b4_ref, o_ref):
        # x_ref: (4, TN) — rows are [x, y, t, 1]; batch lives in the lanes.
        # w1_ref: (64, 4) — input scaling folded into cols 0..2, b1 in col 3.
        x = x_ref[...]

        # layer 1: (64,4) @ (4,TN) -> (64,TN)   (bias already folded in)
        h = act(jnp.dot(w1_ref[...], x, preferred_element_type=jnp.float32))
        # layer 2: (64,64) @ (64,TN) + (64,1)
        h = act(jnp.dot(w2_ref[...], h,
                        preferred_element_type=jnp.float32) + b2_ref[...])
        # layer 3: (64,64) @ (64,TN) + (64,1)
        h = act(jnp.dot(w3_ref[...], h,
                        preferred_element_type=jnp.float32) + b3_ref[...])
        # layer 4: (1,64) @ (64,TN) + scalar b4 (SMEM)
        z = jnp.dot(w4_ref[...], h,
                    preferred_element_type=jnp.float32) + b4_ref[0, 0]

        # SmoothSigmoid(slope=0.5) == 0.5 + 0.5*tanh(0.25*z); lane-dense store.
        o_ref[...] = 0.00159 * (0.5 + 0.5 * act(0.25 * z))

    return pinn_kernel


def _pick_tile(n: int, tile_n: int) -> int:
    """Tile (multiple of 256), clamped so the grid keeps >= 2 balanced steps
    when N allows it (v7x has 2 TensorCores under "parallel")."""
    t = max(256, (tile_n // 256) * 256)
    half = max(256, ((pl.cdiv(n, 2) + 255) // 256) * 256)
    return min(t, half)


def pinn_forward(x, y, t, params, Lx, Ly, T_max, *,
                 tile_n=4096, use_bf16_tanh=False):
    """x, y, t: [N, 1] float32.  Returns [N, 1] float32.

    use_bf16_tanh: opt-in bf16 transcendentals (v6e/v7x only; ~1e-3 accuracy).
    """
    w1, b1, w2, b2, w3, b3, w4, b4 = params   # torch layout: W [out,in], b [out,1]
    N = x.shape[0]

    tile = _pick_tile(N, tile_n)
    n_pad = (-N) % tile
    Np = N + n_pad
    num_tiles = Np // tile

    # Fold per-feature input scaling into W1's columns and b1 as a 4th column.
    scale = jnp.array([1.0 / Lx, 1.0 / Ly, 1.0 / T_max], jnp.float32)
    w1f = jnp.concatenate([(w1 * scale[None, :]).astype(jnp.float32),
                           b1.astype(jnp.float32)], axis=1)            # (64, 4)

    # Batch-in-lanes input slab [4, Np]: free (N,1)->(1,N) reshapes, one concat,
    # one pad (no transpose).  Row 3 is the ones row that carries b1.
    rows = jnp.concatenate([x.reshape(1, -1), y.reshape(1, -1),
                            t.reshape(1, -1)], axis=0).astype(jnp.float32)
    if n_pad:
        rows = jnp.pad(rows, ((0, 0), (0, n_pad)))
    xin = jnp.concatenate([rows, jnp.ones((1, Np), jnp.float32)], axis=0)  # (4, Np)

    full = lambda i: (0, 0)   # weights / biases: whole array every grid step

    # Advisory cost hint so XLA schedules surrounding ops against the kernel.
    flops = 2 * (64 * 4 + 64 * 64 + 64 * 64 + 64) * Np
    transcendentals = (3 * 64 + 1) * Np
    weight_bytes = 4 * (64 * 4 + 2 * (64 * 64 + 64) + 64 + 1)
    bytes_accessed = 4 * (4 + 1) * Np + weight_bytes

    out = pl.pallas_call(
        _make_pinn_kernel(use_bf16_tanh),
        out_shape=jax.ShapeDtypeStruct((1, Np), jnp.float32),
        grid_spec=pltpu.PrefetchScalarGridSpec(
            num_scalar_prefetch=0,
            grid=(num_tiles,),
            in_specs=[
                pl.BlockSpec((4, tile), lambda i: (0, i)),      # input slab tile
                pl.BlockSpec((64, 4), full),                    # w1 (scaled, +b1)
                pl.BlockSpec((64, 64), full),                   # w2
                pl.BlockSpec((64, 1), full),                    # b2
                pl.BlockSpec((64, 64), full),                   # w3
                pl.BlockSpec((64, 1), full),                    # b3
                pl.BlockSpec((1, 64), full),                    # w4
                pl.BlockSpec(memory_space=pltpu.MemorySpace.SMEM),  # b4 scalar
            ],
            out_specs=pl.BlockSpec((1, tile), lambda i: (0, i)),
        ),
        compiler_params=pltpu.CompilerParams(
            dimension_semantics=("parallel",)),
        cost_estimate=pl.CostEstimate(flops=flops,
                                      transcendentals=transcendentals,
                                      bytes_accessed=bytes_accessed),
    )(xin, w1f, w2, b2, w3, b3, w4, b4)

    return out[0, :N].reshape(N, 1)


def init_params(key):
    """Deterministic init mimicking torch.nn.Linear default
    (U[-1/sqrt(fan_in), 1/sqrt(fan_in)]).  Weights stored torch-style [out, in],
    biases as [out, 1]."""
    dims = [(3, 64), (64, 64), (64, 64), (64, 1)]
    params = []
    for (fan_in, fan_out) in dims:
        key, kw, kb = jax.random.split(key, 3)
        bound = 1.0 / jnp.sqrt(fan_in)
        w = jax.random.uniform(kw, (fan_out, fan_in), jnp.float32, -bound, bound)
        b = jax.random.uniform(kb, (fan_out, 1), jnp.float32, -bound, bound)
        params += [w, b]
    return tuple(params)


def pinn_reference(x, y, t, params, Lx, Ly, T_max):
    w1, b1, w2, b2, w3, b3, w4, b4 = params
    xyz = jnp.concatenate([x / Lx, y / Ly, t / T_max], axis=1)        # [N, 3]
    h = jnp.tanh(xyz @ w1.T + b1.T)
    h = jnp.tanh(h @ w2.T + b2.T)
    h = jnp.tanh(h @ w3.T + b3.T)
    z = h @ w4.T + b4.T
    return 0.00159 * (1.0 / (1.0 + jnp.exp(-0.5 * z)))


if __name__ == "__main__":
    D, Lx, Ly, T_max = 0.1, 1.0, 2.0, 5.0

    key = jax.random.PRNGKey(0)
    kp, kx, ky, kt = jax.random.split(key, 4)
    params = init_params(kp)

    # Main check: N large enough that the tile clamp yields a 2-step grid
    # (feeds both v7x TensorCores under "parallel").
    N = 2048
    x = jax.random.uniform(kx, (N, 1), jnp.float32, 0.0, Lx)
    y = jax.random.uniform(ky, (N, 1), jnp.float32, 0.0, Ly)
    t = jax.random.uniform(kt, (N, 1), jnp.float32, 0.0, T_max)

    out = pinn_forward(x, y, t, params, Lx, Ly, T_max)
    out = jax.block_until_ready(out)
    ref = pinn_reference(x, y, t, params, Lx, Ly, T_max)
    assert out.shape == (N, 1)
    assert jnp.allclose(out, ref, atol=1e-5, rtol=1e-5), "mismatch vs reference"

    # Secondary check: non-multiple N exercises the padded tail path.
    N2 = 300
    x2, y2, t2 = x[:N2], y[:N2], t[:N2]
    out2 = jax.block_until_ready(
        pinn_forward(x2, y2, t2, params, Lx, Ly, T_max))
    ref2 = pinn_reference(x2, y2, t2, params, Lx, Ly, T_max)
    assert out2.shape == (N2, 1)
    assert jnp.allclose(out2, ref2, atol=1e-5, rtol=1e-5), "mismatch (padded N)"

    print("KERNEL_OK")
</pallas_src>

<mosaic_0001>
module attributes {stable_mosaic.version = 11 : i64} {
  func.func @pinn_kernel(%arg0: i32, %arg1: memref<4x1024xf32, #tpu.memory_space<vmem>>, %arg2: memref<64x4xf32, #tpu.memory_space<vmem>>, %arg3: memref<64x64xf32, #tpu.memory_space<vmem>>, %arg4: memref<64x1xf32, #tpu.memory_space<vmem>>, %arg5: memref<64x64xf32, #tpu.memory_space<vmem>>, %arg6: memref<64x1xf32, #tpu.memory_space<vmem>>, %arg7: memref<1x64xf32, #tpu.memory_space<vmem>>, %arg8: memref<1x1xf32, #tpu.memory_space<smem>>, %arg9: memref<1x1024xf32, #tpu.memory_space<vmem>>) attributes {dimension_semantics = [#tpu.dimension_semantics<parallel>], iteration_bounds = array<i64: 2>, scalar_prefetch = 0 : i64, scratch_operands = 0 : i64, tpu.core_type = #tpu.core_type<tc>, window_params = [{transform_indices = @transform_0, window_bounds = array<i64: 4, 1024>}, {pipeline_mode = #tpu.pipeline_mode<synchronous>, transform_indices = @transform_1, window_bounds = array<i64: 64, 4>}, {pipeline_mode = #tpu.pipeline_mode<synchronous>, transform_indices = @transform_2, window_bounds = array<i64: 64, 64>}, {pipeline_mode = #tpu.pipeline_mode<synchronous>, transform_indices = @transform_3, window_bounds = array<i64: 64, 1>}, {pipeline_mode = #tpu.pipeline_mode<synchronous>, transform_indices = @transform_4, window_bounds = array<i64: 64, 64>}, {pipeline_mode = #tpu.pipeline_mode<synchronous>, transform_indices = @transform_5, window_bounds = array<i64: 64, 1>}, {pipeline_mode = #tpu.pipeline_mode<synchronous>, transform_indices = @transform_6, window_bounds = array<i64: 1, 64>}, {transform_indices = @transform_7, window_bounds = array<i64: 1, 1>}, {transform_indices = @transform_8, window_bounds = array<i64: 1, 1024>}]} {
    %c0 = arith.constant 0 : index
    %c0_0 = arith.constant 0 : index
    %0 = vector.load %arg1[%c0, %c0_0] : memref<4x1024xf32, #tpu.memory_space<vmem>>, vector<4x1024xf32>
    %c0_1 = arith.constant 0 : index
    %c0_2 = arith.constant 0 : index
    %1 = vector.load %arg2[%c0_1, %c0_2] : memref<64x4xf32, #tpu.memory_space<vmem>>, vector<64x4xf32>
    %cst = arith.constant dense<0.000000e+00> : vector<64x1024xf32>
    %2 = tpu.matmul %1, %0, %cst {dimension_numbers = #tpu.dot_dimension_numbers<[1], [0], [0], [1], [0, 0, 1, 1], [], []>} : vector<64x4xf32>, vector<4x1024xf32>, vector<64x1024xf32> -> vector<64x1024xf32>
    %3 = math.tanh %2 : vector<64x1024xf32>
    %c0_3 = arith.constant 0 : index
    %c0_4 = arith.constant 0 : index
    %4 = vector.load %arg3[%c0_3, %c0_4] : memref<64x64xf32, #tpu.memory_space<vmem>>, vector<64x64xf32>
    %cst_5 = arith.constant dense<0.000000e+00> : vector<64x1024xf32>
    %5 = tpu.matmul %4, %3, %cst_5 {dimension_numbers = #tpu.dot_dimension_numbers<[1], [0], [0], [1], [0, 0, 1, 1], [], []>} : vector<64x64xf32>, vector<64x1024xf32>, vector<64x1024xf32> -> vector<64x1024xf32>
    %c0_6 = arith.constant 0 : index
    %c0_7 = arith.constant 0 : index
    %6 = vector.load %arg4[%c0_6, %c0_7] : memref<64x1xf32, #tpu.memory_space<vmem>>, vector<64x1xf32>
    %7 = vector.broadcast %6 : vector<64x1xf32> to vector<64x1024xf32>
    %8 = arith.addf %5, %7 : vector<64x1024xf32>
    %9 = math.tanh %8 : vector<64x1024xf32>
    %c0_8 = arith.constant 0 : index
    %c0_9 = arith.constant 0 : index
    %10 = vector.load %arg5[%c0_8, %c0_9] : memref<64x64xf32, #tpu.memory_space<vmem>>, vector<64x64xf32>
    %cst_10 = arith.constant dense<0.000000e+00> : vector<64x1024xf32>
    %11 = tpu.matmul %10, %9, %cst_10 {dimension_numbers = #tpu.dot_dimension_numbers<[1], [0], [0], [1], [0, 0, 1, 1], [], []>} : vector<64x64xf32>, vector<64x1024xf32>, vector<64x1024xf32> -> vector<64x1024xf32>
    %c0_11 = arith.constant 0 : index
    %c0_12 = arith.constant 0 : index
    %12 = vector.load %arg6[%c0_11, %c0_12] : memref<64x1xf32, #tpu.memory_space<vmem>>, vector<64x1xf32>
    %13 = vector.broadcast %12 : vector<64x1xf32> to vector<64x1024xf32>
    %14 = arith.addf %11, %13 : vector<64x1024xf32>
    %15 = math.tanh %14 : vector<64x1024xf32>
    %c0_13 = arith.constant 0 : index
    %c0_14 = arith.constant 0 : index
    %16 = vector.load %arg7[%c0_13, %c0_14] : memref<1x64xf32, #tpu.memory_space<vmem>>, vector<1x64xf32>
    %cst_15 = arith.constant dense<0.000000e+00> : vector<1x1024xf32>
    %17 = tpu.matmul %16, %15, %cst_15 {dimension_numbers = #tpu.dot_dimension_numbers<[1], [0], [0], [1], [0, 0, 1, 1], [], []>} : vector<1x64xf32>, vector<64x1024xf32>, vector<1x1024xf32> -> vector<1x1024xf32>
    %c0_16 = arith.constant 0 : index
    %c0_17 = arith.constant 0 : index
    %18 = memref.load %arg8[%c0_16, %c0_17] : memref<1x1xf32, #tpu.memory_space<smem>>
    %19 = vector.broadcast %18 : f32 to vector<1x1024xf32>
    %20 = arith.addf %17, %19 : vector<1x1024xf32>
    %cst_18 = arith.constant 2.500000e-01 : f32
    %21 = vector.broadcast %cst_18 : f32 to vector<1x1024xf32>
    %22 = arith.mulf %21, %20 : vector<1x1024xf32>
    %23 = math.tanh %22 : vector<1x1024xf32>
    %cst_19 = arith.constant 5.000000e-01 : f32
    %24 = vector.broadcast %cst_19 : f32 to vector<1x1024xf32>
    %25 = arith.mulf %24, %23 : vector<1x1024xf32>
    %cst_20 = arith.constant 5.000000e-01 : f32
    %26 = vector.broadcast %cst_20 : f32 to vector<1x1024xf32>
    %27 = arith.addf %26, %25 : vector<1x1024xf32>
    %cst_21 = arith.constant 1.590000e-03 : f32
    %28 = vector.broadcast %cst_21 : f32 to vector<1x1024xf32>
    %29 = arith.mulf %28, %27 : vector<1x1024xf32>
    %c0_22 = arith.constant 0 : index
    %c0_23 = arith.constant 0 : index
    %30 = vector.load %arg9[%c0_22, %c0_23] : memref<1x1024xf32, #tpu.memory_space<vmem>>, vector<1x1024xf32>
    tpu.vector_store %arg9[%c0_22, %c0_23], %29 {strides = array<i32>} : memref<1x1024xf32, #tpu.memory_space<vmem>>, vector<1x1024xf32>,
    return
  }
  func.func @transform_0(%arg0: i32) -> (i32, i32) {
    %c0_i32 = arith.constant 0 : i32
    %c0_i32_0 = arith.constant 0 : i32
    return %c0_i32, %arg0 : i32, i32
  }
  func.func @transform_1(%arg0: i32) -> (i32, i32) {
    %c0_i32 = arith.constant 0 : i32
    %c0_i32_0 = arith.constant 0 : i32
    %c0_i32_1 = arith.constant 0 : i32
    return %c0_i32, %c0_i32_0 : i32, i32
  }
  func.func @transform_2(%arg0: i32) -> (i32, i32) {
    %c0_i32 = arith.constant 0 : i32
    %c0_i32_0 = arith.constant 0 : i32
    %c0_i32_1 = arith.constant 0 : i32
    return %c0_i32, %c0_i32_0 : i32, i32
  }
  func.func @transform_3(%arg0: i32) -> (i32, i32) {
    %c0_i32 = arith.constant 0 : i32
    %c0_i32_0 = arith.constant 0 : i32
    %c0_i32_1 = arith.constant 0 : i32
    return %c0_i32, %c0_i32_0 : i32, i32
  }
  func.func @transform_4(%arg0: i32) -> (i32, i32) {
    %c0_i32 = arith.constant 0 : i32
    %c0_i32_0 = arith.constant 0 : i32
    %c0_i32_1 = arith.constant 0 : i32
    return %c0_i32, %c0_i32_0 : i32, i32
  }
  func.func @transform_5(%arg0: i32) -> (i32, i32) {
    %c0_i32 = arith.constant 0 : i32
    %c0_i32_0 = arith.constant 0 : i32
    %c0_i32_1 = arith.constant 0 : i32
    return %c0_i32, %c0_i32_0 : i32, i32
  }
  func.func @transform_6(%arg0: i32) -> (i32, i32) {
    %c0_i32 = arith.constant 0 : i32
    %c0_i32_0 = arith.constant 0 : i32
    %c0_i32_1 = arith.constant 0 : i32
    return %c0_i32, %c0_i32_0 : i32, i32
  }
  func.func @transform_7(%arg0: i32) -> (i32, i32) {
    %c0_i32 = arith.constant 0 : i32
    %c0_i32_0 = arith.constant 0 : i32
    %c0_i32_1 = arith.constant 0 : i32
    return %c0_i32, %c0_i32_0 : i32, i32
  }
  func.func @transform_8(%arg0: i32) -> (i32, i32) {
    %c0_i32 = arith.constant 0 : i32
    %c0_i32_0 = arith.constant 0 : i32
    return %c0_i32, %arg0 : i32, i32
  }
}

</mosaic_0001>

<llo_original>
// kernel: tpu_custom_call.1
$region0: #{tpu_custom_call.1}
  #allocation0 [shape = 'u32[]', space=smem, size = 0x4, offset = 0x4, fixed_abs, tag = 'smem constant byte address 0x4 - core index']
  #allocation1 [shape = 'u32[144,128]{1,0:T(1,128)}', space=vmem, size = 0x12000, scoped, tag = 'internal scratch']
  #allocation2 [shape = 'f32[1,1]{1,0:T(1,128)S(6)}', space=smem, size = 0x200, scoped, tag = 'scoped memory for tpu_custom_call.1']
  %s0 = inlined_call_operand.vmem [shape: f32[4,2048], index: 0, kind: input, shape index: {}]
  %s1 = inlined_call_operand.vmem [shape: f32[64,4], index: 1, kind: input, shape index: {}]
  %s2 = inlined_call_operand.vmem [shape: f32[64,64], index: 2, kind: input, shape index: {}]
  %s3 = inlined_call_operand.vmem [shape: f32[64,1], index: 3, kind: input, shape index: {}]
  %s4 = inlined_call_operand.vmem [shape: f32[64,64], index: 4, kind: input, shape index: {}]
  %s5 = inlined_call_operand.vmem [shape: f32[64,1], index: 5, kind: input, shape index: {}]
  %s6 = inlined_call_operand.vmem [shape: f32[1,64], index: 6, kind: input, shape index: {}]
  %s7 = inlined_call_operand.<no memory space> [shape: f32[1,1], index: 7, kind: input, shape index: {}]
  %s8 = inlined_call_operand.hbm [shape: f32[1,2048], index: 8, kind: output, shape index: {}]
  %s9 = sld [smem:[#allocation0]]
  $region65: #{tpu_custom_call.1} parent=0
    _
  %s11 = ssub.s32 1, %s9
  %s12 = scalar_select 0, %s11, %s9
  %13 = sst [smem:[#allocation2]] %s7
  $region1: #{tpu_custom_call.1} parent=0
    #allocation3 [shape = 'u8[8192]{0}', space=vmem, size = 0x2000, scoped, tag = 'output window, operand 0']
    #allocation4 [shape = 's32[2]{0}', space=sflag, size = 0x8, scoped, tag = 'scoped memory for tpu_custom_call.1']
    %14 = vsyncpa [#allocation4], 0
    %s15 = scalar_lea.sflag [#allocation4], 1
    %16 = vsyncpa %s15, 0
    loop: start=0, step=1, limit=4
    $region2: #{tpu_custom_call.1} parent=1 // loop_pre_header
      _
    $region3: #{tpu_custom_call.1} parent=1 // loop_header
      %s18 = sphi 0, %s22
      %p19 = scmp.ge.s32.totalorder %s18, 4
      %s28 = sphi 0, %s30
      %s31 = sphi 0, %s28
      %s32 = sphi 0, %s31
      %s48 = sphi 0, %s32
      %s52 = sphi 0, %s52
      %s54 = sphi 0, %s52
      %s55 = sphi 0, %s54
      %s69 = sphi 0, %s55
      %s73 = sphi 0, %s73
      %s75 = sphi 0, %s73
      %s76 = sphi 0, %s75
      %s90 = sphi 0, %s76
      %s94 = sphi 0, %s94
      %s96 = sphi 0, %s94
      %s97 = sphi 0, %s96
      %s111 = sphi 0, %s97
      %s115 = sphi 0, %s115
      %s117 = sphi 0, %s115
      %s118 = sphi 0, %s117
      %s132 = sphi 0, %s118
      %s136 = sphi 0, %s136
      %s138 = sphi 0, %s136
      %s139 = sphi 0, %s138
      %s153 = sphi 0, %s139
      %s157 = sphi 0, %s157
      %s159 = sphi 0, %s157
      %s160 = sphi 0, %s159
      %s174 = sphi 0, %s160
      %s178 = sphi 0, %s178
      %s180 = sphi 0, %s178
      %s181 = sphi 0, %s180
      %s195 = sphi 0, %s181
      %s201 = sphi 0, %s203
      %s204 = sphi 0, %s201
      %s205 = sphi 0, %s204
      %s221 = sphi 0, %s205
    $region4: #{tpu_custom_call.1} parent=1 // loop_header_branch
      %21 = sbr.rel (%p19) target = $region8
    $region5: #{tpu_custom_call.1} parent=1 // loop_body
      %s23 = ssub.s32 %s18, 1
      %s24 = ssub.s32 %s18, 2
      %s25 = sadd.s32 %s18, 1
      %s26 = ssub.s32 %s18, %s25
      %p27 = scmp.eq.s32.totalorder %s26, 0
      %s29 = sadd.s32 %s28, 1
      %s30 = scalar_select %p27, %s28, %s29
      %p33 = pneg %p27
      %p34 = scmp.eq.s32.totalorder %s18, 1
      %p35 = por %p33, %p34
      %p36 = scmp.ne.s32.totalorder %s28, %s31
      %p37 = scmp.eq.s32.totalorder %s18, 0
      %p38 = por %p36, %p37
      %p39 = scmp.ne.s32.totalorder %s28, %s31
      %p40 = scmp.eq.s32.totalorder %s23, 1
      %p41 = por %p39, %p40
      %p42 = scmp.ne.s32.totalorder %s31, %s32
      %p43 = scmp.eq.s32.totalorder %s23, 0
      %p44 = por %p42, %p43
      %p45 = scmp.ne.s32.totalorder %s31, %s32
      %p46 = scmp.eq.s32.totalorder %s24, 1
      %p47 = por %p45, %p46
      %p49 = scmp.ne.s32.totalorder %s32, %s48
      %p50 = scmp.eq.s32.totalorder %s24, 0
      %p51 = por %p49, %p50
      %s53 = sadd.s32 %s52, 1
      %p56 = scmp.eq.s32.totalorder %s18, 1
      %p57 = scmp.ne.s32.totalorder %s52, %s54
      %p58 = scmp.eq.s32.totalorder %s18, 0
      %p59 = por %p57, %p58
      %p60 = scmp.ne.s32.totalorder %s52, %s54
      %p61 = scmp.eq.s32.totalorder %s23, 1
      %p62 = por %p60, %p61
      %p63 = scmp.ne.s32.totalorder %s54, %s55
      %p64 = scmp.eq.s32.totalorder %s23, 0
      %p65 = por %p63, %p64
      %p66 = scmp.ne.s32.totalorder %s54, %s55
      %p67 = scmp.eq.s32.totalorder %s24, 1
      %p68 = por %p66, %p67
      %p70 = scmp.ne.s32.totalorder %s55, %s69
      %p71 = scmp.eq.s32.totalorder %s24, 0
      %p72 = por %p70, %p71
      %s74 = sadd.s32 %s73, 1
      %p77 = scmp.eq.s32.totalorder %s18, 1
      %p78 = scmp.ne.s32.totalorder %s73, %s75
      %p79 = scmp.eq.s32.totalorder %s18, 0
      %p80 = por %p78, %p79
      %p81 = scmp.ne.s32.totalorder %s73, %s75
      %p82 = scmp.eq.s32.totalorder %s23, 1
      %p83 = por %p81, %p82
      %p84 = scmp.ne.s32.totalorder %s75, %s76
      %p85 = scmp.eq.s32.totalorder %s23, 0
      %p86 = por %p84, %p85
      %p87 = scmp.ne.s32.totalorder %s75, %s76
      %p88 = scmp.eq.s32.totalorder %s24, 1
      %p89 = por %p87, %p88
      %p91 = scmp.ne.s32.totalorder %s76, %s90
      %p92 = scmp.eq.s32.totalorder %s24, 0
      %p93 = por %p91, %p92
      %s95 = sadd.s32 %s94, 1
      %p98 = scmp.eq.s32.totalorder %s18, 1
      %p99 = scmp.ne.s32.totalorder %s94, %s96
      %p100 = scmp.eq.s32.totalorder %s18, 0
      %p101 = por %p99, %p100
      %p102 = scmp.ne.s32.totalorder %s94, %s96
      %p103 = scmp.eq.s32.totalorder %s23, 1
      %p104 = por %p102, %p103
      %p105 = scmp.ne.s32.totalorder %s96, %s97
      %p106 = scmp.eq.s32.totalorder %s23, 0
      %p107 = por %p105, %p106
      %p108 = scmp.ne.s32.totalorder %s96, %s97
      %p109 = scmp.eq.s32.totalorder %s24, 1
      %p110 = por %p108, %p109
      %p112 = scmp.ne.s32.totalorder %s97, %s111
      %p113 = scmp.eq.s32.totalorder %s24, 0
      %p114 = por %p112, %p113
      %s116 = sadd.s32 %s115, 1
      %p119 = scmp.eq.s32.totalorder %s18, 1
      %p120 = scmp.ne.s32.totalorder %s115, %s117
      %p121 = scmp.eq.s32.totalorder %s18, 0
      %p122 = por %p120, %p121
      %p123 = scmp.ne.s32.totalorder %s115, %s117
      %p124 = scmp.eq.s32.totalorder %s23, 1
      %p125 = por %p123, %p124
      %p126 = scmp.ne.s32.totalorder %s117, %s118
      %p127 = scmp.eq.s32.totalorder %s23, 0
      %p128 = por %p126, %p127
      %p129 = scmp.ne.s32.totalorder %s117, %s118
      %p130 = scmp.eq.s32.totalorder %s24, 1
      %p131 = por %p129, %p130
      %p133 = scmp.ne.s32.totalorder %s118, %s132
      %p134 = scmp.eq.s32.totalorder %s24, 0
      %p135 = por %p133, %p134
      %s137 = sadd.s32 %s136, 1
      %p140 = scmp.eq.s32.totalorder %s18, 1
      %p141 = scmp.ne.s32.totalorder %s136, %s138
      %p142 = scmp.eq.s32.totalorder %s18, 0
      %p143 = por %p141, %p142
      %p144 = scmp.ne.s32.totalorder %s136, %s138
      %p145 = scmp.eq.s32.totalorder %s23, 1
      %p146 = por %p144, %p145
      %p147 = scmp.ne.s32.totalorder %s138, %s139
      %p148 = scmp.eq.s32.totalorder %s23, 0
      %p149 = por %p147, %p148
      %p150 = scmp.ne.s32.totalorder %s138, %s139
      %p151 = scmp.eq.s32.totalorder %s24, 1
      %p152 = por %p150, %p151
      %p154 = scmp.ne.s32.totalorder %s139, %s153
      %p155 = scmp.eq.s32.totalorder %s24, 0
      %p156 = por %p154, %p155
      %s158 = sadd.s32 %s157, 1
      %p161 = scmp.eq.s32.totalorder %s18, 1
      %p162 = scmp.ne.s32.totalorder %s157, %s159
      %p163 = scmp.eq.s32.totalorder %s18, 0
      %p164 = por %p162, %p163
      %p165 = scmp.ne.s32.totalorder %s157, %s159
      %p166 = scmp.eq.s32.totalorder %s23, 1
      %p167 = por %p165, %p166
      %p168 = scmp.ne.s32.totalorder %s159, %s160
      %p169 = scmp.eq.s32.totalorder %s23, 0
      %p170 = por %p168, %p169
      %p171 = scmp.ne.s32.totalorder %s159, %s160
      %p172 = scmp.eq.s32.totalorder %s24, 1
      %p173 = por %p171, %p172
      %p175 = scmp.ne.s32.totalorder %s160, %s174
      %p176 = scmp.eq.s32.totalorder %s24, 0
      %p177 = por %p175, %p176
      %s179 = sadd.s32 %s178, 1
      %p182 = scmp.eq.s32.totalorder %s18, 1
      %p183 = scmp.ne.s32.totalorder %s178, %s180
      %p184 = scmp.eq.s32.totalorder %s18, 0
      %p185 = por %p183, %p184
      %p186 = scmp.ne.s32.totalorder %s178, %s180
      %p187 = scmp.eq.s32.totalorder %s23, 1
      %p188 = por %p186, %p187
      %p189 = scmp.ne.s32.totalorder %s180, %s181
      %p190 = scmp.eq.s32.totalorder %s23, 0
      %p191 = por %p189, %p190
      %p192 = scmp.ne.s32.totalorder %s180, %s181
      %p193 = scmp.eq.s32.totalorder %s24, 1
      %p194 = por %p192, %p193
      %p196 = scmp.ne.s32.totalorder %s181, %s195
      %p197 = scmp.eq.s32.totalorder %s24, 0
      %p198 = por %p196, %p197
      %s199 = ssub.s32 %s18, %s25
      %p200 = scmp.eq.s32.totalorder %s199, 0
      %s202 = sadd.s32 %s201, 1
      %s203 = scalar_select %p200, %s201, %s202
      %p206 = pneg %p200
      %p207 = scmp.eq.s32.totalorder %s18, 1
      %p208 = por %p206, %p207
      %p209 = scmp.ne.s32.totalorder %s201, %s204
      %p210 = scmp.eq.s32.totalorder %s18, 0
      %p211 = por %p209, %p210
      %p212 = scmp.ne.s32.totalorder %s201, %s204
      %p213 = scmp.eq.s32.totalorder %s23, 1
      %p214 = por %p212, %p213
      %p215 = scmp.ne.s32.totalorder %s204, %s205
      %p216 = scmp.eq.s32.totalorder %s23, 0
      %p217 = por %p215, %p216
      %p218 = scmp.ne.s32.totalorder %s204, %s205
      %p219 = scmp.eq.s32.totalorder %s24, 1
      %p220 = por %p218, %p219
      %p222 = scmp.ne.s32.totalorder %s205, %s221
      %p223 = scmp.eq.s32.totalorder %s24, 0
      %p224 = por %p222, %p223
      %p225 = scmp.le.s32.totalorder 1, %s18
      %p226 = scmp.lt.s32.totalorder %s18, 3
      %p227 = pnand %p225, %p226
      %p228 = pneg %p227
      // Predicated region
      $region9: #{tpu_custom_call.1} parent=5 // pred_check
        _
      $region10: #{tpu_custom_call.1} parent=5 // pred_check_branch
        %230 = sbr.rel (%p227) target = $region12
      $region11: #{tpu_custom_call.1} parent=5 // pred_region
        %s231 = ssub.s32 %s18, 1
        // Predicated region
        $region13: #{tpu_custom_call.1} parent=11 // pred_check
          %p232 = pneg %p65
        $region14: #{tpu_custom_call.1} parent=11 // pred_check_branch
          %234 = sbr.rel (%p232) target = $region16
        $region15: #{tpu_custom_call.1} parent=11 // pred_region
          _
        $region16: #{tpu_custom_call.1} parent=11 // pred_fallthru
          _
        // Predicated region
        $region17: #{tpu_custom_call.1} parent=11 // pred_check
          %p235 = pneg %p86
        $region18: #{tpu_custom_call.1} parent=11 // pred_check_branch
          %237 = sbr.rel (%p235) target = $region20
        $region19: #{tpu_custom_call.1} parent=11 // pred_region
          _
        $region20: #{tpu_custom_call.1} parent=11 // pred_fallthru
          _
        // Predicated region
        $region21: #{tpu_custom_call.1} parent=11 // pred_check
          %p238 = pneg %p107
        $region22: #{tpu_custom_call.1} parent=11 // pred_check_branch
          %240 = sbr.rel (%p238) target = $region24
        $region23: #{tpu_custom_call.1} parent=11 // pred_region
          _
        $region24: #{tpu_custom_call.1} parent=11 // pred_fallthru
          _
        // Predicated region
        $region25: #{tpu_custom_call.1} parent=11 // pred_check
          %p241 = pneg %p128
        $region26: #{tpu_custom_call.1} parent=11 // pred_check_branch
          %243 = sbr.rel (%p241) target = $region28
        $region27: #{tpu_custom_call.1} parent=11 // pred_region
          _
        $region28: #{tpu_custom_call.1} parent=11 // pred_fallthru
          _
        // Predicated region
        $region29: #{tpu_custom_call.1} parent=11 // pred_check
          %p244 = pneg %p149
        $region30: #{tpu_custom_call.1} parent=11 // pred_check_branch
          %246 = sbr.rel (%p244) target = $region32
        $region31: #{tpu_custom_call.1} parent=11 // pred_region
          _
        $region32: #{tpu_custom_call.1} parent=11 // pred_fallthru
          _
        // Predicated region
        $region33: #{tpu_custom_call.1} parent=11 // pred_check
          %p247 = pneg %p170
        $region34: #{tpu_custom_call.1} parent=11 // pred_check_branch
          %249 = sbr.rel (%p247) target = $region36
        $region35: #{tpu_custom_call.1} parent=11 // pred_region
          _
        $region36: #{tpu_custom_call.1} parent=11 // pred_fallthru
          _
        // Predicated region
        $region37: #{tpu_custom_call.1} parent=11 // pred_check
          %p250 = pneg %p191
        $region38: #{tpu_custom_call.1} parent=11 // pred_check_branch
          %252 = sbr.rel (%p250) target = $region40
        $region39: #{tpu_custom_call.1} parent=11 // pred_region
          _
        $region40: #{tpu_custom_call.1} parent=11 // pred_fallthru
          _
      $region12: #{tpu_custom_call.1} parent=5 // pred_fallthru
        _
      %p253 = scmp.lt.s32.totalorder %s18, 2
      // Predicated region
      $region41: #{tpu_custom_call.1} parent=5 // pred_check
        %p254 = pneg %p253
      $region42: #{tpu_custom_call.1} parent=5 // pred_check_branch
        %256 = sbr.rel (%p254) target = $region44
      $region43: #{tpu_custom_call.1} parent=5 // pred_region
        // Predicated region
        $region45: #{tpu_custom_call.1} parent=43 // pred_check
          %p257 = pneg %p38
        $region46: #{tpu_custom_call.1} parent=43 // pred_check_branch
          %259 = sbr.rel (%p257) target = $region48
        $region47: #{tpu_custom_call.1} parent=43 // pred_region
          %s260 = smul.u32 8, %s18
          %p261 = scmp.lt.s32.totalorder %s260, 15
          %s262 = scalar_select %p261, %s260, 15
          %s263 = smul.addr %s262, 4
          %s264 = scalar_lea.vmem %s0, %s263
          %s265 = smul.u32 8, %s18
        $region48: #{tpu_custom_call.1} parent=43 // pred_fallthru
          _
      $region44: #{tpu_custom_call.1} parent=5 // pred_fallthru
        _
      %p266 = scmp.le.s32.totalorder 1, %s18
      %p267 = scmp.lt.s32.totalorder %s18, 3
      %p268 = pnand %p266, %p267
      %p269 = pneg %p268
      // Predicated region
      $region49: #{tpu_custom_call.1} parent=5 // pred_check
        _
      $region50: #{tpu_custom_call.1} parent=5 // pred_check_branch
        %271 = sbr.rel (%p268) target = $region52
      $region51: #{tpu_custom_call.1} parent=5 // pred_region
        %s272 = ssub.s32 %s18, 1
        %s273 = smul.u32 8, %s23
        %p274 = scmp.lt.s32.totalorder %s273, 15
        %s275 = scalar_select %p274, %s273, 15
        %s276 = smul.addr %s275, 4
        %s277 = scalar_lea.vmem %s0, %s276
        %p278 = pneg %p44
        %p279 = pneg %p41
        %p280 = pneg %p65
        %p281 = pneg %p62
        %p282 = pneg %p86
        %p283 = pneg %p83
        %p284 = pneg %p107
        %p285 = pneg %p104
        %p286 = pneg %p128
        %p287 = pneg %p125
        %p288 = pneg %p149
        %p289 = pneg %p146
        %p290 = pneg %p170
        %p291 = pneg %p167
        %p292 = pneg %p191
        %p293 = pneg %p188
        %p294 = pneg %p217
        %p295 = pneg %p214
        %s296 = sand.u32 %s204, 1
        %s297 = scalar_lea.sflag [#allocation4], %s296
        %s298 = sand.u32 %s204, 1
        %s299 = smul.addr %s298, 8
        %s300 = scalar_lea.vmem [#allocation3], %s299
        %s301 = smul.u32 8, %s23
        %p302 = scmp.lt.s32.totalorder %s301, 15
        %s303 = scalar_select %p302, %s301, 15
        %s304 = smul.addr %s303, 4
        %s305 = scalar_lea.vmem %s0, %s304
        %s306 = smul.u32 8, %s23
        %s307 = smul.u32 8, %s23
        %v308 = vld [vmem:[%s305] sm:$0xff]
        %v309 = vld [vmem:[%s305 + $0x8] sm:$0xff]
        %v310 = vld [vmem:[%s305 + $0x10] sm:$0xff]
        %v311 = vld [vmem:[%s305 + $0x18] sm:$0xff]
        %v312 = vld [vmem:[%s1] sm:$0xff]
        %v313 = vld [vmem:[%s1 + $0x8] sm:$0xff]
        %v314 = vld [vmem:[%s1 + $0x10] sm:$0xff]
        %v315 = vld [vmem:[%s1 + $0x18] sm:$0xff]
        %v316 = vld [vmem:[%s1 + $0x20] sm:$0xff]
        %v317 = vld [vmem:[%s1 + $0x28] sm:$0xff]
        %v318 = vld [vmem:[%s1 + $0x30] sm:$0xff]
        %v319 = vld [vmem:[%s1 + $0x38] sm:$0xff]
        %v324 = vcombine.high %v308, %v308
        %v325 = vcombine.high %v309, %v309
        %v326 = vcombine.high %v310, %v310
        %v327 = vcombine.high %v311, %v311
        %vm328 = vcmask 31744
        %v330 = vsel %vm328, %v312, 0
        %v333 = vsel %vm328, %v313, 0
        %v336 = vsel %vm328, %v314, 0
        %v339 = vsel %vm328, %v315, 0
        %v342 = vsel %vm328, %v316, 0
        %v345 = vsel %vm328, %v317, 0
        %v348 = vsel %vm328, %v318, 0
        %v351 = vsel %vm328, %v319, 0
        %vm353 = vcmask 1043456
        %v354 = vsel %vm353, %v308, 0
        %v356 = vsel %vm353, %v324, 0
        %v358 = vsel %vm353, %v309, 0
        %v360 = vsel %vm353, %v325, 0
        %v362 = vsel %vm353, %v310, 0
        %v364 = vsel %vm353, %v326, 0
        %v366 = vsel %vm353, %v311, 0
        %v368 = vsel %vm353, %v327, 0
        %370 = vmatprep.subr.mxu0 %v356
        %371 = vmatpush1.msra.mxu0 %v354
        %372 = vmatprep.subr.mxu0 0.0
        %373 = vmatpush1.msra.mxu0 0.0
        %374 = vmatprep.subr.mxu0 0.0
        %375 = vmatpush1.msra.mxu0 0.0
        %376 = vmatprep.subr.mxu0 0.0
        %377 = vmatpush1.msra.mxu0 0.0
        %378 = vmatprep.subr.mxu0 0.0
        %379 = vmatpush1.msra.mxu0 0.0
        %380 = vmatprep.subr.mxu0 0.0
        %381 = vmatpush1.msra.mxu0 0.0
        %382 = vmatprep.subr.mxu0 0.0
        %383 = vmatpush1.msra.mxu0 0.0
        %384 = vmatprep.subr.mxu0 0.0
        %385 = vmatpush1.msra.mxu0 0.0
        %386 = vmatprep.subr.mxu0 0.0
        %387 = vmatpush1.msra.mxu0 0.0
        %388 = vmatprep.subr.mxu0 0.0
        %389 = vmatpush1.msra.mxu0 0.0
        %390 = vmatprep.subr.mxu0 0.0
        %391 = vmatpush1.msra.mxu0 0.0
        %392 = vmatprep.subr.mxu0 0.0
        %393 = vmatpush1.msra.mxu0 0.0
        %394 = vmatprep.subr.mxu0 0.0
        %395 = vmatpush1.msra.mxu0 0.0
        %396 = vmatprep.subr.mxu0 0.0
        %397 = vmatpush1.msra.mxu0 0.0
        %398 = vmatprep.subr.mxu0 0.0
        %399 = vmatpush1.msra.mxu0 0.0
        %400 = vmatprep.subr.mxu0 0.0
        %401 = vmatpush1.msra.mxu0 0.0
        %402 = vmatprep.subr.mxu0 0.0
        %403 = vmatpush1.msra.mxu0 0.0
        %404 = vmatprep.subr.mxu0 0.0
        %405 = vmatpush1.msra.mxu0 0.0
        %406 = vmatprep.subr.mxu0 0.0
        %407 = vmatpush1.msra.mxu0 0.0
        %408 = vmatprep.subr.mxu0 0.0
        %409 = vmatpush1.msra.mxu0 0.0
        %410 = vmatprep.subr.mxu0 0.0
        %411 = vmatpush1.msra.mxu0 0.0
        %412 = vmatprep.subr.mxu0 0.0
        %413 = vmatpush1.msra.mxu0 0.0
        %414 = vmatprep.subr.mxu0 0.0
        %415 = vmatpush1.msra.mxu0 0.0
        %416 = vmatprep.subr.mxu0 0.0
        %417 = vmatpush1.msra.mxu0 0.0
        %418 = vmatprep.subr.mxu0 0.0
        %419 = vmatpush1.msra.mxu0 0.0
        %420 = vmatprep.subr.mxu0 0.0
        %421 = vmatpush1.msra.mxu0 0.0
        %422 = vmatprep.subr.mxu0 0.0
        %423 = vmatpush1.msra.mxu0 0.0
        %424 = vmatprep.subr.mxu0 0.0
        %425 = vmatpush1.msra.mxu0 0.0
        %426 = vmatprep.subr.mxu0 0.0
        %427 = vmatpush1.msra.mxu0 0.0
        %428 = vmatprep.subr.mxu0 0.0
        %429 = vmatpush1.msra.mxu0 0.0
        %430 = vmatprep.subr.mxu0 0.0
        %431 = vmatpush1.msra.mxu0 0.0
        %432 = vmatprep.subr.mxu0 0.0
        %433 = vmatpush1.msra.mxu0 0.0
        %434 = vmatprep.mubr.f32.mxu0 0.0
        %435 = vmatmul.mubr.f32.gmra.mrb[0].mxu0 %v330
        %v436 = vpop.f32.mrb[0].mxu0
        %v437 = vadd.f32 0.0, %v436
        %v438 = vpop.f32.mrb[0].mxu0
        %v439 = vadd.f32 0.0, %v438
        %440 = vmatprep.mubr.f32.mxu0 0.0
        %441 = vmatmul.mubr.f32.gmra.mrb[0].mxu0 %v333
        %v442 = vpop.f32.mrb[0].mxu0
        %v443 = vadd.f32 0.0, %v442
        %v444 = vpop.f32.mrb[0].mxu0
        %v445 = vadd.f32 0.0, %v444
        %446 = vmatprep.mubr.f32.mxu0 0.0
        %447 = vmatmul.mubr.f32.gmra.mrb[0].mxu0 %v336
        %v448 = vpop.f32.mrb[0].mxu0
        %v449 = vadd.f32 0.0, %v448
        %v450 = vpop.f32.mrb[0].mxu0
        %v451 = vadd.f32 0.0, %v450
        %452 = vmatprep.mubr.f32.mxu0 0.0
        %453 = vmatmul.mubr.f32.gmra.mrb[0].mxu0 %v339
        %v454 = vpop.f32.mrb[0].mxu0
        %v455 = vadd.f32 0.0, %v454
        %v456 = vpop.f32.mrb[0].mxu0
        %v457 = vadd.f32 0.0, %v456
        %458 = vmatprep.mubr.f32.mxu0 0.0
        %459 = vmatmul.mubr.f32.gmra.mrb[0].mxu0 %v342
        %v460 = vpop.f32.mrb[0].mxu0
        %v461 = vadd.f32 0.0, %v460
        %v462 = vpop.f32.mrb[0].mxu0
        %v463 = vadd.f32 0.0, %v462
        %464 = vmatprep.mubr.f32.mxu0 0.0
        %465 = vmatmul.mubr.f32.gmra.mrb[0].mxu0 %v345
        %v466 = vpop.f32.mrb[0].mxu0
        %v467 = vadd.f32 0.0, %v466
        %v468 = vpop.f32.mrb[0].mxu0
        %v469 = vadd.f32 0.0, %v468
        %470 = vmatprep.mubr.f32.mxu0 0.0
        %471 = vmatmul.mubr.f32.gmra.mrb[0].mxu0 %v348
        %v472 = vpop.f32.mrb[0].mxu0
        %v473 = vadd.f32 0.0, %v472
        %v474 = vpop.f32.mrb[0].mxu0
        %v475 = vadd.f32 0.0, %v474
        %476 = vmatprep.mubr.f32.mxu0 0.0
        %477 = vmatmul.mubr.f32.gmra.mrb[0].mxu0 %v351
        %v478 = vpop.f32.mrb[0].mxu0
        %v479 = vadd.f32 0.0, %v478
        %v480 = vpop.f32.mrb[0].mxu0
        %v481 = vadd.f32 0.0, %v480
        %482 = vdwg.mxu0
        %483 = vmatprep.subr.mxu0 %v360
        %484 = vmatpush1.msra.mxu0 %v358
        %485 = vmatprep.subr.mxu0 0.0
        %486 = vmatpush1.msra.mxu0 0.0
        %487 = vmatprep.subr.mxu0 0.0
        %488 = vmatpush1.msra.mxu0 0.0
        %489 = vmatprep.subr.mxu0 0.0
        %490 = vmatpush1.msra.mxu0 0.0
        %491 = vmatprep.subr.mxu0 0.0
        %492 = vmatpush1.msra.mxu0 0.0
        %493 = vmatprep.subr.mxu0 0.0
        %494 = vmatpush1.msra.mxu0 0.0
        %495 = vmatprep.subr.mxu0 0.0
        %496 = vmatpush1.msra.mxu0 0.0
        %497 = vmatprep.subr.mxu0 0.0
        %498 = vmatpush1.msra.mxu0 0.0
        %499 = vmatprep.subr.mxu0 0.0
        %500 = vmatpush1.msra.mxu0 0.0
        %501 = vmatprep.subr.mxu0 0.0
        %502 = vmatpush1.msra.mxu0 0.0
        %503 = vmatprep.subr.mxu0 0.0
        %504 = vmatpush1.msra.mxu0 0.0
        %505 = vmatprep.subr.mxu0 0.0
        %506 = vmatpush1.msra.mxu0 0.0
        %507 = vmatprep.subr.mxu0 0.0
        %508 = vmatpush1.msra.mxu0 0.0
        %509 = vmatprep.subr.mxu0 0.0
        %510 = vmatpush1.msra.mxu0 0.0
        %511 = vmatprep.subr.mxu0 0.0
        %512 = vmatpush1.msra.mxu0 0.0
        %513 = vmatprep.subr.mxu0 0.0
        %514 = vmatpush1.msra.mxu0 0.0
        %515 = vmatprep.subr.mxu0 0.0
        %516 = vmatpush1.msra.mxu0 0.0
        %517 = vmatprep.subr.mxu0 0.0
        %518 = vmatpush1.msra.mxu0 0.0
        %519 = vmatprep.subr.mxu0 0.0
        %520 = vmatpush1.msra.mxu0 0.0
        %521 = vmatprep.subr.mxu0 0.0
        %522 = vmatpush1.msra.mxu0 0.0
        %523 = vmatprep.subr.mxu0 0.0
        %524 = vmatpush1.msra.mxu0 0.0
        %525 = vmatprep.subr.mxu0 0.0
        %526 = vmatpush1.msra.mxu0 0.0
        %527 = vmatprep.subr.mxu0 0.0
        %528 = vmatpush1.msra.mxu0 0.0
        %529 = vmatprep.subr.mxu0 0.0
        %530 = vmatpush1.msra.mxu0 0.0
        %531 = vmatprep.subr.mxu0 0.0
        %532 = vmatpush1.msra.mxu0 0.0
        %533 = vmatprep.subr.mxu0 0.0
        %534 = vmatpush1.msra.mxu0 0.0
        %535 = vmatprep.subr.mxu0 0.0
        %536 = vmatpush1.msra.mxu0 0.0
        %537 = vmatprep.subr.mxu0 0.0
        %538 = vmatpush1.msra.mxu0 0.0
        %539 = vmatprep.subr.mxu0 0.0
        %540 = vmatpush1.msra.mxu0 0.0
        %541 = vmatprep.subr.mxu0 0.0
        %542 = vmatpush1.msra.mxu0 0.0
        %543 = vmatprep.subr.mxu0 0.0
        %544 = vmatpush1.msra.mxu0 0.0
        %545 = vmatprep.subr.mxu0 0.0
        %546 = vmatpush1.msra.mxu0 0.0
        %547 = vmatprep.mubr.f32.mxu0 0.0
        %548 = vmatmul.mubr.f32.gmra.mrb[0].mxu0 %v330
        %v549 = vpop.f32.mrb[0].mxu0
        %v550 = vadd.f32 0.0, %v549
        %v551 = vpop.f32.mrb[0].mxu0
        %v552 = vadd.f32 0.0, %v551
        %553 = vmatprep.mubr.f32.mxu0 0.0
        %554 = vmatmul.mubr.f32.gmra.mrb[0].mxu0 %v333
        %v555 = vpop.f32.mrb[0].mxu0
        %v556 = vadd.f32 0.0, %v555
        %v557 = vpop.f32.mrb[0].mxu0
        %v558 = vadd.f32 0.0, %v557
        %559 = vmatprep.mubr.f32.mxu0 0.0
        %560 = vmatmul.mubr.f32.gmra.mrb[0].mxu0 %v336
        %v561 = vpop.f32.mrb[0].mxu0
        %v562 = vadd.f32 0.0, %v561
        %v563 = vpop.f32.mrb[0].mxu0
        %v564 = vadd.f32 0.0, %v563
        %565 = vmatprep.mubr.f32.mxu0 0.0
        %566 = vmatmul.mubr.f32.gmra.mrb[0].mxu0 %v339
        %v567 = vpop.f32.mrb[0].mxu0
        %v568 = vadd.f32 0.0, %v567
        %v569 = vpop.f32.mrb[0].mxu0
        %v570 = vadd.f32 0.0, %v569
        %571 = vmatprep.mubr.f32.mxu0 0.0
        %572 = vmatmul.mubr.f32.gmra.mrb[0].mxu0 %v342
        %v573 = vpop.f32.mrb[0].mxu0
        %v574 = vadd.f32 0.0, %v573
        %v575 = vpop.f32.mrb[0].mxu0
        %v576 = vadd.f32 0.0, %v575
        %577 = vmatprep.mubr.f32.mxu0 0.0
        %578 = vmatmul.mubr.f32.gmra.mrb[0].mxu0 %v345
        %v579 = vpop.f32.mrb[0].mxu0
        %v580 = vadd.f32 0.0, %v579
        %v581 = vpop.f32.mrb[0].mxu0
        %v582 = vadd.f32 0.0, %v581
        %583 = vmatprep.mubr.f32.mxu0 0.0
        %584 = vmatmul.mubr.f32.gmra.mrb[0].mxu0 %v348
        %v585 = vpop.f32.mrb[0].mxu0
        %v586 = vadd.f32 0.0, %v585
        %v587 = vpop.f32.mrb[0].mxu0
        %v588 = vadd.f32 0.0, %v587
        %589 = vmatprep.mubr.f32.mxu0 0.0
        %590 = vmatmul.mubr.f32.gmra.mrb[0].mxu0 %v351
        %v591 = vpop.f32.mrb[0].mxu0
        %v592 = vadd.f32 0.0, %v591
        %v593 = vpop.f32.mrb[0].mxu0
        %v594 = vadd.f32 0.0, %v593
        %595 = vdwg.mxu0
        %596 = vmatprep.subr.mxu0 %v364
        %597 = vmatpush1.msra.mxu0 %v362
        %598 = vmatprep.subr.mxu0 0.0
        %599 = vmatpush1.msra.mxu0 0.0
        %600 = vmatprep.subr.mxu0 0.0
        %601 = vmatpush1.msra.mxu0 0.0
        %602 = vmatprep.subr.mxu0 0.0
        %603 = vmatpush1.msra.mxu0 0.0
        %604 = vmatprep.subr.mxu0 0.0
        %605 = vmatpush1.msra.mxu0 0.0
        %606 = vmatprep.subr.mxu0 0.0
        %607 = vmatpush1.msra.mxu0 0.0
        %608 = vmatprep.subr.mxu0 0.0
        %609 = vmatpush1.msra.mxu0 0.0
        %610 = vmatprep.subr.mxu0 0.0
        %611 = vmatpush1.msra.mxu0 0.0
        %612 = vmatprep.subr.mxu0 0.0
        %613 = vmatpush1.msra.mxu0 0.0
        %614 = vmatprep.subr.mxu0 0.0
        %615 = vmatpush1.msra.mxu0 0.0
        %616 = vmatprep.subr.mxu0 0.0
        %617 = vmatpush1.msra.mxu0 0.0
        %618 = vmatprep.subr.mxu0 0.0
        %619 = vmatpush1.msra.mxu0 0.0
        %620 = vmatprep.subr.mxu0 0.0
        %621 = vmatpush1.msra.mxu0 0.0
        %622 = vmatprep.subr.mxu0 0.0
        %623 = vmatpush1.msra.mxu0 0.0
        %624 = vmatprep.subr.mxu0 0.0
        %625 = vmatpush1.msra.mxu0 0.0
        %626 = vmatprep.subr.mxu0 0.0
        %627 = vmatpush1.msra.mxu0 0.0
        %628 = vmatprep.subr.mxu0 0.0
        %629 = vmatpush1.msra.mxu0 0.0
        %630 = vmatprep.subr.mxu0 0.0
        %631 = vmatpush1.msra.mxu0 0.0
        %632 = vmatprep.subr.mxu0 0.0
        %633 = vmatpush1.msra.mxu0 0.0
        %634 = vmatprep.subr.mxu0 0.0
        %635 = vmatpush1.msra.mxu0 0.0
        %636 = vmatprep.subr.mxu0 0.0
        %637 = vmatpush1.msra.mxu0 0.0
        %638 = vmatprep.subr.mxu0 0.0
        %639 = vmatpush1.msra.mxu0 0.0
        %640 = vmatprep.subr.mxu0 0.0
        %641 = vmatpush1.msra.mxu0 0.0
        %642 = vmatprep.subr.mxu0 0.0
        %643 = vmatpush1.msra.mxu0 0.0
        %644 = vmatprep.subr.mxu0 0.0
        %645 = vmatpush1.msra.mxu0 0.0
        %646 = vmatprep.subr.mxu0 0.0
        %647 = vmatpush1.msra.mxu0 0.0
        %648 = vmatprep.subr.mxu0 0.0
        %649 = vmatpush1.msra.mxu0 0.0
        %650 = vmatprep.subr.mxu0 0.0
        %651 = vmatpush1.msra.mxu0 0.0
        %652 = vmatprep.subr.mxu0 0.0
        %653 = vmatpush1.msra.mxu0 0.0
        %654 = vmatprep.subr.mxu0 0.0
        %655 = vmatpush1.msra.mxu0 0.0
        %656 = vmatprep.subr.mxu0 0.0
        %657 = vmatpush1.msra.mxu0 0.0
        %658 = vmatprep.subr.mxu0 0.0
        %659 = vmatpush1.msra.mxu0 0.0
        %660 = vmatprep.mubr.f32.mxu0 0.0
        %661 = vmatmul.mubr.f32.gmra.mrb[0].mxu0 %v330
        %v662 = vpop.f32.mrb[0].mxu0
        %v663 = vadd.f32 0.0, %v662
        %v664 = vpop.f32.mrb[0].mxu0
        %v665 = vadd.f32 0.0, %v664
        %666 = vmatprep.mubr.f32.mxu0 0.0
        %667 = vmatmul.mubr.f32.gmra.mrb[0].mxu0 %v333
        %v668 = vpop.f32.mrb[0].mxu0
        %v669 = vadd.f32 0.0, %v668
        %v670 = vpop.f32.mrb[0].mxu0
        %v671 = vadd.f32 0.0, %v670
        %672 = vmatprep.mubr.f32.mxu0 0.0
        %673 = vmatmul.mubr.f32.gmra.mrb[0].mxu0 %v336
        %v674 = vpop.f32.mrb[0].mxu0
        %v675 = vadd.f32 0.0, %v674
        %v676 = vpop.f32.mrb[0].mxu0
        %v677 = vadd.f32 0.0, %v676
        %678 = vmatprep.mubr.f32.mxu0 0.0
        %679 = vmatmul.mubr.f32.gmra.mrb[0].mxu0 %v339
        %v680 = vpop.f32.mrb[0].mxu0
        %v681 = vadd.f32 0.0, %v680
        %v682 = vpop.f32.mrb[0].mxu0
        %v683 = vadd.f32 0.0, %v682
        %684 = vmatprep.mubr.f32.mxu0 0.0
        %685 = vmatmul.mubr.f32.gmra.mrb[0].mxu0 %v342
        %v686 = vpop.f32.mrb[0].mxu0
        %v687 = vadd.f32 0.0, %v686
        %v688 = vpop.f32.mrb[0].mxu0
        %v689 = vadd.f32 0.0, %v688
        %690 = vmatprep.mubr.f32.mxu0 0.0
        %691 = vmatmul.mubr.f32.gmra.mrb[0].mxu0 %v345
        %v692 = vpop.f32.mrb[0].mxu0
        %v693 = vadd.f32 0.0, %v692
        %v694 = vpop.f32.mrb[0].mxu0
        %v695 = vadd.f32 0.0, %v694
        %696 = vmatprep.mubr.f32.mxu0 0.0
        %697 = vmatmul.mubr.f32.gmra.mrb[0].mxu0 %v348
        %v698 = vpop.f32.mrb[0].mxu0
        %v699 = vadd.f32 0.0, %v698
        %v700 = vpop.f32.mrb[0].mxu0
        %v701 = vadd.f32 0.0, %v700
        %702 = vmatprep.mubr.f32.mxu0 0.0
        %703 = vmatmul.mubr.f32.gmra.mrb[0].mxu0 %v351
        %v704 = vpop.f32.mrb[0].mxu0
        %v705 = vadd.f32 0.0, %v704
        %v706 = vpop.f32.mrb[0].mxu0
        %v707 = vadd.f32 0.0, %v706
        %708 = vdwg.mxu0
        %709 = vmatprep.subr.mxu0 %v368
        %710 = vmatpush1.msra.mxu0 %v366
        %711 = vmatprep.subr.mxu0 0.0
        %712 = vmatpush1.msra.mxu0 0.0
        %713 = vmatprep.subr.mxu0 0.0
        %714 = vmatpush1.msra.mxu0 0.0
        %715 = vmatprep.subr.mxu0 0.0
        %716 = vmatpush1.msra.mxu0 0.0
        %717 = vmatprep.subr.mxu0 0.0
        %718 = vmatpush1.msra.mxu0 0.0
        %719 = vmatprep.subr.mxu0 0.0
        %720 = vmatpush1.msra.mxu0 0.0
        %721 = vmatprep.subr.mxu0 0.0
        %722 = vmatpush1.msra.mxu0 0.0
        %723 = vmatprep.subr.mxu0 0.0
        %724 = vmatpush1.msra.mxu0 0.0
        %725 = vmatprep.subr.mxu0 0.0
        %726 = vmatpush1.msra.mxu0 0.0
        %727 = vmatprep.subr.mxu0 0.0
        %728 = vmatpush1.msra.mxu0 0.0
        %729 = vmatprep.subr.mxu0 0.0
        %730 = vmatpush1.msra.mxu0 0.0
        %731 = vmatprep.subr.mxu0 0.0
        %732 = vmatpush1.msra.mxu0 0.0
        %733 = vmatprep.subr.mxu0 0.0
        %734 = vmatpush1.msra.mxu0 0.0
        %735 = vmatprep.subr.mxu0 0.0
        %736 = vmatpush1.msra.mxu0 0.0
        %737 = vmatprep.subr.mxu0 0.0
        %738 = vmatpush1.msra.mxu0 0.0
        %739 = vmatprep.subr.mxu0 0.0
        %740 = vmatpush1.msra.mxu0 0.0
        %741 = vmatprep.subr.mxu0 0.0
        %742 = vmatpush1.msra.mxu0 0.0
        %743 = vmatprep.subr.mxu0 0.0
        %744 = vmatpush1.msra.mxu0 0.0
        %745 = vmatprep.subr.mxu0 0.0
        %746 = vmatpush1.msra.mxu0 0.0
        %747 = vmatprep.subr.mxu0 0.0
        %748 = vmatpush1.msra.mxu0 0.0
        %749 = vmatprep.subr.mxu0 0.0
        %750 = vmatpush1.msra.mxu0 0.0
        %751 = vmatprep.subr.mxu0 0.0
        %752 = vmatpush1.msra.mxu0 0.0
        %753 = vmatprep.subr.mxu0 0.0
        %754 = vmatpush1.msra.mxu0 0.0
        %755 = vmatprep.subr.mxu0 0.0
        %756 = vmatpush1.msra.mxu0 0.0
        %757 = vmatprep.subr.mxu0 0.0
        %758 = vmatpush1.msra.mxu0 0.0
        %759 = vmatprep.subr.mxu0 0.0
        %760 = vmatpush1.msra.mxu0 0.0
        %761 = vmatprep.subr.mxu0 0.0
        %762 = vmatpush1.msra.mxu0 0.0
        %763 = vmatprep.subr.mxu0 0.0
        %764 = vmatpush1.msra.mxu0 0.0
        %765 = vmatprep.subr.mxu0 0.0
        %766 = vmatpush1.msra.mxu0 0.0
        %767 = vmatprep.subr.mxu0 0.0
        %768 = vmatpush1.msra.mxu0 0.0
        %769 = vmatprep.subr.mxu0 0.0
        %770 = vmatpush1.msra.mxu0 0.0
        %771 = vmatprep.subr.mxu0 0.0
        %772 = vmatpush1.msra.mxu0 0.0
        %773 = vmatprep.mubr.f32.mxu0 0.0
        %774 = vmatmul.mubr.f32.gmra.mrb[0].mxu0 %v330
        %v775 = vpop.f32.mrb[0].mxu0
        %v776 = vadd.f32 0.0, %v775
        %v777 = vpop.f32.mrb[0].mxu0
        %v778 = vadd.f32 0.0, %v777
        %779 = vmatprep.mubr.f32.mxu0 0.0
        %780 = vmatmul.mubr.f32.gmra.mrb[0].mxu0 %v333
        %v781 = vpop.f32.mrb[0].mxu0
        %v782 = vadd.f32 0.0, %v781
        %v783 = vpop.f32.mrb[0].mxu0
        %v784 = vadd.f32 0.0, %v783
        %785 = vmatprep.mubr.f32.mxu0 0.0
        %786 = vmatmul.mubr.f32.gmra.mrb[0].mxu0 %v336
        %v787 = vpop.f32.mrb[0].mxu0
        %v788 = vadd.f32 0.0, %v787
        %v789 = vpop.f32.mrb[0].mxu0
        %v790 = vadd.f32 0.0, %v789
        %791 = vmatprep.mubr.f32.mxu0 0.0
        %792 = vmatmul.mubr.f32.gmra.mrb[0].mxu0 %v339
        %v793 = vpop.f32.mrb[0].mxu0
        %v794 = vadd.f32 0.0, %v793
        %v795 = vpop.f32.mrb[0].mxu0
        %v796 = vadd.f32 0.0, %v795
        %797 = vmatprep.mubr.f32.mxu0 0.0
        %798 = vmatmul.mubr.f32.gmra.mrb[0].mxu0 %v342
        %v799 = vpop.f32.mrb[0].mxu0
        %v800 = vadd.f32 0.0, %v799
        %v801 = vpop.f32.mrb[0].mxu0
        %v802 = vadd.f32 0.0, %v801
        %803 = vmatprep.mubr.f32.mxu0 0.0
        %804 = vmatmul.mubr.f32.gmra.mrb[0].mxu0 %v345
        %v805 = vpop.f32.mrb[0].mxu0
        %v806 = vadd.f32 0.0, %v805
        %v807 = vpop.f32.mrb[0].mxu0
        %v808 = vadd.f32 0.0, %v807
        %809 = vmatprep.mubr.f32.mxu0 0.0
        %810 = vmatmul.mubr.f32.gmra.mrb[0].mxu0 %v348
        %v811 = vpop.f32.mrb[0].mxu0
        %v812 = vadd.f32 0.0, %v811
        %v813 = vpop.f32.mrb[0].mxu0
        %v814 = vadd.f32 0.0, %v813
        %815 = vmatprep.mubr.f32.mxu0 0.0
        %816 = vmatmul.mubr.f32.gmra.mrb[0].mxu0 %v351
        %v817 = vpop.f32.mrb[0].mxu0
        %v818 = vadd.f32 0.0, %v817
        %v819 = vpop.f32.mrb[0].mxu0
        %v820 = vadd.f32 0.0, %v819
        %821 = vdwg.mxu0
        %v822 = vtanh.pop %v437
        %v823 = vtanh.pop %v439
        %v824 = vtanh.pop %v550
        %v825 = vtanh.pop %v552
        %v826 = vtanh.pop %v663
        %v827 = vtanh.pop %v665
        %v828 = vtanh.pop %v776
        %v829 = vtanh.pop %v778
        %v830 = vtanh.pop %v443
        %v831 = vtanh.pop %v445
        %v832 = vtanh.pop %v556
        %v833 = vtanh.pop %v558
        %v834 = vtanh.pop %v669
        %v835 = vtanh.pop %v671
        %v836 = vtanh.pop %v782
        %v837 = vtanh.pop %v784
        %v838 = vtanh.pop %v449
        %v839 = vtanh.pop %v451
        %v840 = vtanh.pop %v562
        %v841 = vtanh.pop %v564
        %v842 = vtanh.pop %v675
        %v843 = vtanh.pop %v677
        %v844 = vtanh.pop %v788
        %v845 = vtanh.pop %v790
        %v846 = vtanh.pop %v455
        %v847 = vtanh.pop %v457
        %v848 = vtanh.pop %v568
        %v849 = vtanh.pop %v570
        %v850 = vtanh.pop %v681
        %v851 = vtanh.pop %v683
        %v852 = vtanh.pop %v794
        %v853 = vtanh.pop %v796
        %v854 = vtanh.pop %v461
        %v855 = vtanh.pop %v463
        %v856 = vtanh.pop %v574
        %v857 = vtanh.pop %v576
        %v858 = vtanh.pop %v687
        %v859 = vtanh.pop %v689
        %v860 = vtanh.pop %v800
        %v861 = vtanh.pop %v802
        %v862 = vtanh.pop %v467
        %v863 = vtanh.pop %v469
        %v864 = vtanh.pop %v580
        %v865 = vtanh.pop %v582
        %v866 = vtanh.pop %v693
        %v867 = vtanh.pop %v695
        %v868 = vtanh.pop %v806
        %v869 = vtanh.pop %v808
        %v870 = vtanh.pop %v473
        %v871 = vtanh.pop %v475
        %v872 = vtanh.pop %v586
        %v873 = vtanh.pop %v588
        %v874 = vtanh.pop %v699
        %v875 = vtanh.pop %v701
        %v876 = vtanh.pop %v812
        %v877 = vtanh.pop %v814
        %v878 = vtanh.pop %v479
        %v879 = vtanh.pop %v481
        %v880 = vtanh.pop %v592
        %v881 = vtanh.pop %v594
        %v882 = vtanh.pop %v705
        %v883 = vtanh.pop %v707
        %v884 = vtanh.pop %v818
        %v885 = vtanh.pop %v820
        %v886 = vld [vmem:[%s2] sm:$0xff]
        %v887 = vld [vmem:[%s2 + $0x8] sm:$0xff]
        %v888 = vld [vmem:[%s2 + $0x10] sm:$0xff]
        %v889 = vld [vmem:[%s2 + $0x18] sm:$0xff]
        %v890 = vld [vmem:[%s2 + $0x20] sm:$0xff]
        %v891 = vld [vmem:[%s2 + $0x28] sm:$0xff]
        %v892 = vld [vmem:[%s2 + $0x30] sm:$0xff]
        %v893 = vld [vmem:[%s2 + $0x38] sm:$0xff]
        %v894 = vld [vmem:[%s3] sm:$0xff]
        %v895 = vld [vmem:[%s3 + $0x8] sm:$0xff]
        %v896 = vld [vmem:[%s3 + $0x10] sm:$0xff]
        %v897 = vld [vmem:[%s3 + $0x18] sm:$0xff]
        %v898 = vld [vmem:[%s3 + $0x20] sm:$0xff]
        %v899 = vld [vmem:[%s3 + $0x28] sm:$0xff]
        %v900 = vld [vmem:[%s3 + $0x30] sm:$0xff]
        %v901 = vld [vmem:[%s3 + $0x38] sm:$0xff]
        %903 = vset.pattern.permute.xlu0 0
        %904 = vperm.xlu0 %903, %v894
        %v905 = vpop.permute.xlu0 %904
        %908 = vset.pattern.permute.xlu0 0
        %909 = vperm.xlu0 %908, %v895
        %v910 = vpop.permute.xlu0 %909
        %913 = vset.pattern.permute.xlu0 0
        %914 = vperm.xlu0 %913, %v896
        %v915 = vpop.permute.xlu0 %914
        %918 = vset.pattern.permute.xlu0 0
        %919 = vperm.xlu0 %918, %v897
        %v920 = vpop.permute.xlu0 %919
        %923 = vset.pattern.permute.xlu0 0
        %924 = vperm.xlu0 %923, %v898
        %v925 = vpop.permute.xlu0 %924
        %928 = vset.pattern.permute.xlu0 0
        %929 = vperm.xlu0 %928, %v899
        %v930 = vpop.permute.xlu0 %929
        %933 = vset.pattern.permute.xlu0 0
        %934 = vperm.xlu0 %933, %v900
        %v935 = vpop.permute.xlu0 %934
        %938 = vset.pattern.permute.xlu0 0
        %939 = vperm.xlu0 %938, %v901
        %v940 = vpop.permute.xlu0 %939
        %vm942 = vcmask 523264
        %v944 = vsel %vm942, %v886, 0
        %v947 = vsel %vm942, %v887, 0
        %v950 = vsel %vm942, %v888, 0
        %v953 = vsel %vm942, %v889, 0
        %v956 = vsel %vm942, %v890, 0
        %v959 = vsel %vm942, %v891, 0
        %v962 = vsel %vm942, %v892, 0
        %v965 = vsel %vm942, %v893, 0
        %967 = vmatprep.subr.mxu0 %v823
        %968 = vmatpush1.msra.mxu0 %v822
        %969 = vmatprep.subr.mxu0 %v831
        %970 = vmatpush1.msra.mxu0 %v830
        %971 = vmatprep.subr.mxu0 %v839
        %972 = vmatpush1.msra.mxu0 %v838
        %973 = vmatprep.subr.mxu0 %v847
        %974 = vmatpush1.msra.mxu0 %v846
        %975 = vmatprep.subr.mxu0 %v855
        %976 = vmatpush1.msra.mxu0 %v854
        %977 = vmatprep.subr.mxu0 %v863
        %978 = vmatpush1.msra.mxu0 %v862
        %979 = vmatprep.subr.mxu0 %v871
        %980 = vmatpush1.msra.mxu0 %v870
        %981 = vmatprep.subr.mxu0 %v879
        %982 = vmatpush1.msra.mxu0 %v878
        %983 = vmatprep.subr.mxu0 0.0
        %984 = vmatpush1.msra.mxu0 0.0
        %985 = vmatprep.subr.mxu0 0.0
        %986 = vmatpush1.msra.mxu0 0.0
        %987 = vmatprep.subr.mxu0 0.0
        %988 = vmatpush1.msra.mxu0 0.0
        %989 = vmatprep.subr.mxu0 0.0
        %990 = vmatpush1.msra.mxu0 0.0
        %991 = vmatprep.subr.mxu0 0.0
        %992 = vmatpush1.msra.mxu0 0.0
        %993 = vmatprep.subr.mxu0 0.0
        %994 = vmatpush1.msra.mxu0 0.0
        %995 = vmatprep.subr.mxu0 0.0
        %996 = vmatpush1.msra.mxu0 0.0
        %997 = vmatprep.subr.mxu0 0.0
        %998 = vmatpush1.msra.mxu0 0.0
        %999 = vmatprep.subr.mxu0 0.0
        %1000 = vmatpush1.msra.mxu0 0.0
        %1001 = vmatprep.subr.mxu0 0.0
        %1002 = vmatpush1.msra.mxu0 0.0
        %1003 = vmatprep.subr.mxu0 0.0
        %1004 = vmatpush1.msra.mxu0 0.0
        %1005 = vmatprep.subr.mxu0 0.0
        %1006 = vmatpush1.msra.mxu0 0.0
        %1007 = vmatprep.subr.mxu0 0.0
        %1008 = vmatpush1.msra.mxu0 0.0
        %1009 = vmatprep.subr.mxu0 0.0
        %1010 = vmatpush1.msra.mxu0 0.0
        %1011 = vmatprep.subr.mxu0 0.0
        %1012 = vmatpush1.msra.mxu0 0.0
        %1013 = vmatprep.subr.mxu0 0.0
        %1014 = vmatpush1.msra.mxu0 0.0
        %1015 = vmatprep.subr.mxu0 0.0
        %1016 = vmatpush1.msra.mxu0 0.0
        %1017 = vmatprep.subr.mxu0 0.0
        %1018 = vmatpush1.msra.mxu0 0.0
        %1019 = vmatprep.subr.mxu0 0.0
        %1020 = vmatpush1.msra.mxu0 0.0
        %1021 = vmatprep.subr.mxu0 0.0
        %1022 = vmatpush1.msra.mxu0 0.0
        %1023 = vmatprep.subr.mxu0 0.0
        %1024 = vmatpush1.msra.mxu0 0.0
        %1025 = vmatprep.subr.mxu0 0.0
        %1026 = vmatpush1.msra.mxu0 0.0
        %1027 = vmatprep.subr.mxu0 0.0
        %1028 = vmatpush1.msra.mxu0 0.0
        %1029 = vmatprep.subr.mxu0 0.0
        %1030 = vmatpush1.msra.mxu0 0.0
        %1031 = vmatprep.mubr.f32.mxu0 0.0
        %1032 = vmatmul.mubr.f32.gmra.mrb[0].mxu0 %v944
        %v1033 = vpop.f32.mrb[0].mxu0
        %v1034 = vadd.f32 %v905, %v1033
        %v1035 = vpop.f32.mrb[0].mxu0
        %v1036 = vadd.f32 %v905, %v1035
        %1037 = vmatprep.mubr.f32.mxu0 0.0
        %1038 = vmatmul.mubr.f32.gmra.mrb[0].mxu0 %v947
        %v1039 = vpop.f32.mrb[0].mxu0
        %v1040 = vadd.f32 %v910, %v1039
        %v1041 = vpop.f32.mrb[0].mxu0
        %v1042 = vadd.f32 %v910, %v1041
        %1043 = vmatprep.mubr.f32.mxu0 0.0
        %1044 = vmatmul.mubr.f32.gmra.mrb[0].mxu0 %v950
        %v1045 = vpop.f32.mrb[0].mxu0
        %v1046 = vadd.f32 %v915, %v1045
        %v1047 = vpop.f32.mrb[0].mxu0
        %v1048 = vadd.f32 %v915, %v1047
        %1049 = vmatprep.mubr.f32.mxu0 0.0
        %1050 = vmatmul.mubr.f32.gmra.mrb[0].mxu0 %v953
        %v1051 = vpop.f32.mrb[0].mxu0
        %v1052 = vadd.f32 %v920, %v1051
        %v1053 = vpop.f32.mrb[0].mxu0
        %v1054 = vadd.f32 %v920, %v1053
        %1055 = vmatprep.mubr.f32.mxu0 0.0
        %1056 = vmatmul.mubr.f32.gmra.mrb[0].mxu0 %v956
        %v1057 = vpop.f32.mrb[0].mxu0
        %v1058 = vadd.f32 %v925, %v1057
        %v1059 = vpop.f32.mrb[0].mxu0
        %v1060 = vadd.f32 %v925, %v1059
        %1061 = vmatprep.mubr.f32.mxu0 0.0
        %1062 = vmatmul.mubr.f32.gmra.mrb[0].mxu0 %v959
        %v1063 = vpop.f32.mrb[0].mxu0
        %v1064 = vadd.f32 %v930, %v1063
        %v1065 = vpop.f32.mrb[0].mxu0
        %v1066 = vadd.f32 %v930, %v1065
        %1067 = vmatprep.mubr.f32.mxu0 0.0
        %1068 = vmatmul.mubr.f32.gmra.mrb[0].mxu0 %v962
        %v1069 = vpop.f32.mrb[0].mxu0
        %v1070 = vadd.f32 %v935, %v1069
        %v1071 = vpop.f32.mrb[0].mxu0
        %v1072 = vadd.f32 %v935, %v1071
        %1073 = vmatprep.mubr.f32.mxu0 0.0
        %1074 = vmatmul.mubr.f32.gmra.mrb[0].mxu0 %v965
        %v1075 = vpop.f32.mrb[0].mxu0
        %v1076 = vadd.f32 %v940, %v1075
        %v1077 = vpop.f32.mrb[0].mxu0
        %v1078 = vadd.f32 %v940, %v1077
        %1079 = vdwg.mxu0
        %1080 = vmatprep.subr.mxu0 %v825
        %1081 = vmatpush1.msra.mxu0 %v824
        %1082 = vmatprep.subr.mxu0 %v833
        %1083 = vmatpush1.msra.mxu0 %v832
        %1084 = vmatprep.subr.mxu0 %v841
        %1085 = vmatpush1.msra.mxu0 %v840
        %1086 = vmatprep.subr.mxu0 %v849
        %1087 = vmatpush1.msra.mxu0 %v848
        %1088 = vmatprep.subr.mxu0 %v857
        %1089 = vmatpush1.msra.mxu0 %v856
        %1090 = vmatprep.subr.mxu0 %v865
        %1091 = vmatpush1.msra.mxu0 %v864
        %1092 = vmatprep.subr.mxu0 %v873
        %1093 = vmatpush1.msra.mxu0 %v872
        %1094 = vmatprep.subr.mxu0 %v881
        %1095 = vmatpush1.msra.mxu0 %v880
        %1096 = vmatprep.subr.mxu0 0.0
        %1097 = vmatpush1.msra.mxu0 0.0
        %1098 = vmatprep.subr.mxu0 0.0
        %1099 = vmatpush1.msra.mxu0 0.0
        %1100 = vmatprep.subr.mxu0 0.0
        %1101 = vmatpush1.msra.mxu0 0.0
        %1102 = vmatprep.subr.mxu0 0.0
        %1103 = vmatpush1.msra.mxu0 0.0
        %1104 = vmatprep.subr.mxu0 0.0
        %1105 = vmatpush1.msra.mxu0 0.0
        %1106 = vmatprep.subr.mxu0 0.0
        %1107 = vmatpush1.msra.mxu0 0.0
        %1108 = vmatprep.subr.mxu0 0.0
        %1109 = vmatpush1.msra.mxu0 0.0
        %1110 = vmatprep.subr.mxu0 0.0
        %1111 = vmatpush1.msra.mxu0 0.0
        %1112 = vmatprep.subr.mxu0 0.0
        %1113 = vmatpush1.msra.mxu0 0.0
        %1114 = vmatprep.subr.mxu0 0.0
        %1115 = vmatpush1.msra.mxu0 0.0
        %1116 = vmatprep.subr.mxu0 0.0
        %1117 = vmatpush1.msra.mxu0 0.0
        %1118 = vmatprep.subr.mxu0 0.0
        %1119 = vmatpush1.msra.mxu0 0.0
        %1120 = vmatprep.subr.mxu0 0.0
        %1121 = vmatpush1.msra.mxu0 0.0
        %1122 = vmatprep.subr.mxu0 0.0
        %1123 = vmatpush1.msra.mxu0 0.0
        %1124 = vmatprep.subr.mxu0 0.0
        %1125 = vmatpush1.msra.mxu0 0.0
        %1126 = vmatprep.subr.mxu0 0.0
        %1127 = vmatpush1.msra.mxu0 0.0
        %1128 = vmatprep.subr.mxu0 0.0
        %1129 = vmatpush1.msra.mxu0 0.0
        %1130 = vmatprep.subr.mxu0 0.0
        %1131 = vmatpush1.msra.mxu0 0.0
        %1132 = vmatprep.subr.mxu0 0.0
        %1133 = vmatpush1.msra.mxu0 0.0
        %1134 = vmatprep.subr.mxu0 0.0
        %1135 = vmatpush1.msra.mxu0 0.0
        %1136 = vmatprep.subr.mxu0 0.0
        %1137 = vmatpush1.msra.mxu0 0.0
        %1138 = vmatprep.subr.mxu0 0.0
        %1139 = vmatpush1.msra.mxu0 0.0
        %1140 = vmatprep.subr.mxu0 0.0
        %1141 = vmatpush1.msra.mxu0 0.0
        %1142 = vmatprep.subr.mxu0 0.0
        %1143 = vmatpush1.msra.mxu0 0.0
        %1144 = vmatprep.mubr.f32.mxu0 0.0
        %1145 = vmatmul.mubr.f32.gmra.mrb[0].mxu0 %v944
        %v1146 = vpop.f32.mrb[0].mxu0
        %v1147 = vadd.f32 %v905, %v1146
        %v1148 = vpop.f32.mrb[0].mxu0
        %v1149 = vadd.f32 %v905, %v1148
        %1150 = vmatprep.mubr.f32.mxu0 0.0
        %1151 = vmatmul.mubr.f32.gmra.mrb[0].mxu0 %v947
        %v1152 = vpop.f32.mrb[0].mxu0
        %v1153 = vadd.f32 %v910, %v1152
        %v1154 = vpop.f32.mrb[0].mxu0
        %v1155 = vadd.f32 %v910, %v1154
        %1156 = vmatprep.mubr.f32.mxu0 0.0
        %1157 = vmatmul.mubr.f32.gmra.mrb[0].mxu0 %v950
        %v1158 = vpop.f32.mrb[0].mxu0
        %v1159 = vadd.f32 %v915, %v1158
        %v1160 = vpop.f32.mrb[0].mxu0
        %v1161 = vadd.f32 %v915, %v1160
        %1162 = vmatprep.mubr.f32.mxu0 0.0
        %1163 = vmatmul.mubr.f32.gmra.mrb[0].mxu0 %v953
        %v1164 = vpop.f32.mrb[0].mxu0
        %v1165 = vadd.f32 %v920, %v1164
        %v1166 = vpop.f32.mrb[0].mxu0
        %v1167 = vadd.f32 %v920, %v1166
        %1168 = vmatprep.mubr.f32.mxu0 0.0
        %1169 = vmatmul.mubr.f32.gmra.mrb[0].mxu0 %v956
        %v1170 = vpop.f32.mrb[0].mxu0
        %v1171 = vadd.f32 %v925, %v1170
        %v1172 = vpop.f32.mrb[0].mxu0
        %v1173 = vadd.f32 %v925, %v1172
        %1174 = vmatprep.mubr.f32.mxu0 0.0
        %1175 = vmatmul.mubr.f32.gmra.mrb[0].mxu0 %v959
        %v1176 = vpop.f32.mrb[0].mxu0
        %v1177 = vadd.f32 %v930, %v1176
        %v1178 = vpop.f32.mrb[0].mxu0
        %v1179 = vadd.f32 %v930, %v1178
        %1180 = vmatprep.mubr.f32.mxu0 0.0
        %1181 = vmatmul.mubr.f32.gmra.mrb[0].mxu0 %v962
        %v1182 = vpop.f32.mrb[0].mxu0
        %v1183 = vadd.f32 %v935, %v1182
        %v1184 = vpop.f32.mrb[0].mxu0
        %v1185 = vadd.f32 %v935, %v1184
        %1186 = vmatprep.mubr.f32.mxu0 0.0
        %1187 = vmatmul.mubr.f32.gmra.mrb[0].mxu0 %v965
        %v1188 = vpop.f32.mrb[0].mxu0
        %v1189 = vadd.f32 %v940, %v1188
        %v1190 = vpop.f32.mrb[0].mxu0
        %v1191 = vadd.f32 %v940, %v1190
        %1192 = vdwg.mxu0
        %1193 = vmatprep.subr.mxu0 %v827
        %1194 = vmatpush1.msra.mxu0 %v826
        %1195 = vmatprep.subr.mxu0 %v835
        %1196 = vmatpush1.msra.mxu0 %v834
        %1197 = vmatprep.subr.mxu0 %v843
        %1198 = vmatpush1.msra.mxu0 %v842
        %1199 = vmatprep.subr.mxu0 %v851
        %1200 = vmatpush1.msra.mxu0 %v850
        %1201 = vmatprep.subr.mxu0 %v859
        %1202 = vmatpush1.msra.mxu0 %v858
        %1203 = vmatprep.subr.mxu0 %v867
        %1204 = vmatpush1.msra.mxu0 %v866
        %1205 = vmatprep.subr.mxu0 %v875
        %1206 = vmatpush1.msra.mxu0 %v874
        %1207 = vmatprep.subr.mxu0 %v883
        %1208 = vmatpush1.msra.mxu0 %v882
        %1209 = vmatprep.subr.mxu0 0.0
        %1210 = vmatpush1.msra.mxu0 0.0
        %1211 = vmatprep.subr.mxu0 0.0
        %1212 = vmatpush1.msra.mxu0 0.0
        %1213 = vmatprep.subr.mxu0 0.0
        %1214 = vmatpush1.msra.mxu0 0.0
        %1215 = vmatprep.subr.mxu0 0.0
        %1216 = vmatpush1.msra.mxu0 0.0
        %1217 = vmatprep.subr.mxu0 0.0
        %1218 = vmatpush1.msra.mxu0 0.0
        %1219 = vmatprep.subr.mxu0 0.0
        %1220 = vmatpush1.msra.mxu0 0.0
        %1221 = vmatprep.subr.mxu0 0.0
        %1222 = vmatpush1.msra.mxu0 0.0
        %1223 = vmatprep.subr.mxu0 0.0
        %1224 = vmatpush1.msra.mxu0 0.0
        %1225 = vmatprep.subr.mxu0 0.0
        %1226 = vmatpush1.msra.mxu0 0.0
        %1227 = vmatprep.subr.mxu0 0.0
        %1228 = vmatpush1.msra.mxu0 0.0
        %1229 = vmatprep.subr.mxu0 0.0
        %1230 = vmatpush1.msra.mxu0 0.0
        %1231 = vmatprep.subr.mxu0 0.0
        %1232 = vmatpush1.msra.mxu0 0.0
        %1233 = vmatprep.subr.mxu0 0.0
        %1234 = vmatpush1.msra.mxu0 0.0
        %1235 = vmatprep.subr.mxu0 0.0
        %1236 = vmatpush1.msra.mxu0 0.0
        %1237 = vmatprep.subr.mxu0 0.0
        %1238 = vmatpush1.msra.mxu0 0.0
        %1239 = vmatprep.subr.mxu0 0.0
        %1240 = vmatpush1.msra.mxu0 0.0
        %1241 = vmatprep.subr.mxu0 0.0
        %1242 = vmatpush1.msra.mxu0 0.0
        %1243 = vmatprep.subr.mxu0 0.0
        %1244 = vmatpush1.msra.mxu0 0.0
        %1245 = vmatprep.subr.mxu0 0.0
        %1246 = vmatpush1.msra.mxu0 0.0
        %1247 = vmatprep.subr.mxu0 0.0
        %1248 = vmatpush1.msra.mxu0 0.0
        %1249 = vmatprep.subr.mxu0 0.0
        %1250 = vmatpush1.msra.mxu0 0.0
        %1251 = vmatprep.subr.mxu0 0.0
        %1252 = vmatpush1.msra.mxu0 0.0
        %1253 = vmatprep.subr.mxu0 0.0
        %1254 = vmatpush1.msra.mxu0 0.0
        %1255 = vmatprep.subr.mxu0 0.0
        %1256 = vmatpush1.msra.mxu0 0.0
        %1257 = vmatprep.mubr.f32.mxu0 0.0
        %1258 = vmatmul.mubr.f32.gmra.mrb[0].mxu0 %v944
        %v1259 = vpop.f32.mrb[0].mxu0
        %v1260 = vadd.f32 %v905, %v1259
        %v1261 = vpop.f32.mrb[0].mxu0
        %v1262 = vadd.f32 %v905, %v1261
        %1263 = vmatprep.mubr.f32.mxu0 0.0
        %1264 = vmatmul.mubr.f32.gmra.mrb[0].mxu0 %v947
        %v1265 = vpop.f32.mrb[0].mxu0
        %v1266 = vadd.f32 %v910, %v1265
        %v1267 = vpop.f32.mrb[0].mxu0
        %v1268 = vadd.f32 %v910, %v1267
        %1269 = vmatprep.mubr.f32.mxu0 0.0
        %1270 = vmatmul.mubr.f32.gmra.mrb[0].mxu0 %v950
        %v1271 = vpop.f32.mrb[0].mxu0
        %v1272 = vadd.f32 %v915, %v1271
        %v1273 = vpop.f32.mrb[0].mxu0
        %v1274 = vadd.f32 %v915, %v1273
        %1275 = vmatprep.mubr.f32.mxu0 0.0
        %1276 = vmatmul.mubr.f32.gmra.mrb[0].mxu0 %v953
        %v1277 = vpop.f32.mrb[0].mxu0
        %v1278 = vadd.f32 %v920, %v1277
        %v1279 = vpop.f32.mrb[0].mxu0
        %v1280 = vadd.f32 %v920, %v1279
        %1281 = vmatprep.mubr.f32.mxu0 0.0
        %1282 = vmatmul.mubr.f32.gmra.mrb[0].mxu0 %v956
        %v1283 = vpop.f32.mrb[0].mxu0
        %v1284 = vadd.f32 %v925, %v1283
        %v1285 = vpop.f32.mrb[0].mxu0
        %v1286 = vadd.f32 %v925, %v1285
        %1287 = vmatprep.mubr.f32.mxu0 0.0
        %1288 = vmatmul.mubr.f32.gmra.mrb[0].mxu0 %v959
        %v1289 = vpop.f32.mrb[0].mxu0
        %v1290 = vadd.f32 %v930, %v1289
        %v1291 = vpop.f32.mrb[0].mxu0
        %v1292 = vadd.f32 %v930, %v1291
        %1293 = vmatprep.mubr.f32.mxu0 0.0
        %1294 = vmatmul.mubr.f32.gmra.mrb[0].mxu0 %v962
        %v1295 = vpop.f32.mrb[0].mxu0
        %v1296 = vadd.f32 %v935, %v1295
        %v1297 = vpop.f32.mrb[0].mxu0
        %v1298 = vadd.f32 %v935, %v1297
        %1299 = vmatprep.mubr.f32.mxu0 0.0
        %1300 = vmatmul.mubr.f32.gmra.mrb[0].mxu0 %v965
        %v1301 = vpop.f32.mrb[0].mxu0
        %v1302 = vadd.f32 %v940, %v1301
        %v1303 = vpop.f32.mrb[0].mxu0
        %v1304 = vadd.f32 %v940, %v1303
        %1305 = vdwg.mxu0
        %1306 = vmatprep.subr.mxu0 %v829
        %1307 = vmatpush1.msra.mxu0 %v828
        %1308 = vmatprep.subr.mxu0 %v837
        %1309 = vmatpush1.msra.mxu0 %v836
        %1310 = vmatprep.subr.mxu0 %v845
        %1311 = vmatpush1.msra.mxu0 %v844
        %1312 = vmatprep.subr.mxu0 %v853
        %1313 = vmatpush1.msra.mxu0 %v852
        %1314 = vmatprep.subr.mxu0 %v861
        %1315 = vmatpush1.msra.mxu0 %v860
        %1316 = vmatprep.subr.mxu0 %v869
        %1317 = vmatpush1.msra.mxu0 %v868
        %1318 = vmatprep.subr.mxu0 %v877
        %1319 = vmatpush1.msra.mxu0 %v876
        %1320 = vmatprep.subr.mxu0 %v885
        %1321 = vmatpush1.msra.mxu0 %v884
        %1322 = vmatprep.subr.mxu0 0.0
        %1323 = vmatpush1.msra.mxu0 0.0
        %1324 = vmatprep.subr.mxu0 0.0
        %1325 = vmatpush1.msra.mxu0 0.0
        %1326 = vmatprep.subr.mxu0 0.0
        %1327 = vmatpush1.msra.mxu0 0.0
        %1328 = vmatprep.subr.mxu0 0.0
        %1329 = vmatpush1.msra.mxu0 0.0
        %1330 = vmatprep.subr.mxu0 0.0
        %1331 = vmatpush1.msra.mxu0 0.0
        %1332 = vmatprep.subr.mxu0 0.0
        %1333 = vmatpush1.msra.mxu0 0.0
        %1334 = vmatprep.subr.mxu0 0.0
        %1335 = vmatpush1.msra.mxu0 0.0
        %1336 = vmatprep.subr.mxu0 0.0
        %1337 = vmatpush1.msra.mxu0 0.0
        %1338 = vmatprep.subr.mxu0 0.0
        %1339 = vmatpush1.msra.mxu0 0.0
        %1340 = vmatprep.subr.mxu0 0.0
        %1341 = vmatpush1.msra.mxu0 0.0
        %1342 = vmatprep.subr.mxu0 0.0
        %1343 = vmatpush1.msra.mxu0 0.0
        %1344 = vmatprep.subr.mxu0 0.0
        %1345 = vmatpush1.msra.mxu0 0.0
        %1346 = vmatprep.subr.mxu0 0.0
        %1347 = vmatpush1.msra.mxu0 0.0
        %1348 = vmatprep.subr.mxu0 0.0
        %1349 = vmatpush1.msra.mxu0 0.0
        %1350 = vmatprep.subr.mxu0 0.0
        %1351 = vmatpush1.msra.mxu0 0.0
        %1352 = vmatprep.subr.mxu0 0.0
        %1353 = vmatpush1.msra.mxu0 0.0
        %1354 = vmatprep.subr.mxu0 0.0
        %1355 = vmatpush1.msra.mxu0 0.0
        %1356 = vmatprep.subr.mxu0 0.0
        %1357 = vmatpush1.msra.mxu0 0.0
        %1358 = vmatprep.subr.mxu0 0.0
        %1359 = vmatpush1.msra.mxu0 0.0
        %1360 = vmatprep.subr.mxu0 0.0
        %1361 = vmatpush1.msra.mxu0 0.0
        %1362 = vmatprep.subr.mxu0 0.0
        %1363 = vmatpush1.msra.mxu0 0.0
        %1364 = vmatprep.subr.mxu0 0.0
        %1365 = vmatpush1.msra.mxu0 0.0
        %1366 = vmatprep.subr.mxu0 0.0
        %1367 = vmatpush1.msra.mxu0 0.0
        %1368 = vmatprep.subr.mxu0 0.0
        %1369 = vmatpush1.msra.mxu0 0.0
        %1370 = vmatprep.mubr.f32.mxu0 0.0
        %1371 = vmatmul.mubr.f32.gmra.mrb[0].mxu0 %v944
        %v1372 = vpop.f32.mrb[0].mxu0
        %v1373 = vadd.f32 %v905, %v1372
        %v1374 = vpop.f32.mrb[0].mxu0
        %v1375 = vadd.f32 %v905, %v1374
        %1376 = vmatprep.mubr.f32.mxu0 0.0
        %1377 = vmatmul.mubr.f32.gmra.mrb[0].mxu0 %v947
        %v1378 = vpop.f32.mrb[0].mxu0
        %v1379 = vadd.f32 %v910, %v1378
        %v1380 = vpop.f32.mrb[0].mxu0
        %v1381 = vadd.f32 %v910, %v1380
        %1382 = vmatprep.mubr.f32.mxu0 0.0
        %1383 = vmatmul.mubr.f32.gmra.mrb[0].mxu0 %v950
        %v1384 = vpop.f32.mrb[0].mxu0
        %v1385 = vadd.f32 %v915, %v1384
        %v1386 = vpop.f32.mrb[0].mxu0
        %v1387 = vadd.f32 %v915, %v1386
        %1388 = vmatprep.mubr.f32.mxu0 0.0
        %1389 = vmatmul.mubr.f32.gmra.mrb[0].mxu0 %v953
        %v1390 = vpop.f32.mrb[0].mxu0
        %v1391 = vadd.f32 %v920, %v1390
        %v1392 = vpop.f32.mrb[0].mxu0
        %v1393 = vadd.f32 %v920, %v1392
        %1394 = vmatprep.mubr.f32.mxu0 0.0
        %1395 = vmatmul.mubr.f32.gmra.mrb[0].mxu0 %v956
        %v1396 = vpop.f32.mrb[0].mxu0
        %v1397 = vadd.f32 %v925, %v1396
        %v1398 = vpop.f32.mrb[0].mxu0
        %v1399 = vadd.f32 %v925, %v1398
        %1400 = vmatprep.mubr.f32.mxu0 0.0
        %1401 = vmatmul.mubr.f32.gmra.mrb[0].mxu0 %v959
        %v1402 = vpop.f32.mrb[0].mxu0
        %v1403 = vadd.f32 %v930, %v1402
        %v1404 = vpop.f32.mrb[0].mxu0
        %v1405 = vadd.f32 %v930, %v1404
        %1406 = vmatprep.mubr.f32.mxu0 0.0
        %1407 = vmatmul.mubr.f32.gmra.mrb[0].mxu0 %v962
        %v1408 = vpop.f32.mrb[0].mxu0
        %v1409 = vadd.f32 %v935, %v1408
        %v1410 = vpop.f32.mrb[0].mxu0
        %v1411 = vadd.f32 %v935, %v1410
        %1412 = vmatprep.mubr.f32.mxu0 0.0
        %1413 = vmatmul.mubr.f32.gmra.mrb[0].mxu0 %v965
        %v1414 = vpop.f32.mrb[0].mxu0
        %v1415 = vadd.f32 %v940, %v1414
        %v1416 = vpop.f32.mrb[0].mxu0
        %v1417 = vadd.f32 %v940, %v1416
        %1418 = vdwg.mxu0
        %v1419 = vtanh.pop %v1034
        %v1420 = vtanh.pop %v1036
        %v1421 = vtanh.pop %v1147
        %v1422 = vtanh.pop %v1149
        %v1423 = vtanh.pop %v1260
        %v1424 = vtanh.pop %v1262
        %v1425 = vtanh.pop %v1373
        %v1426 = vtanh.pop %v1375
        %v1427 = vtanh.pop %v1040
        %v1428 = vtanh.pop %v1042
        %v1429 = vtanh.pop %v1153
        %v1430 = vtanh.pop %v1155
        %v1431 = vtanh.pop %v1266
        %v1432 = vtanh.pop %v1268
        %v1433 = vtanh.pop %v1379
        %v1434 = vtanh.pop %v1381
        %v1435 = vtanh.pop %v1046
        %v1436 = vtanh.pop %v1048
        %v1437 = vtanh.pop %v1159
        %v1438 = vtanh.pop %v1161
        %v1439 = vtanh.pop %v1272
        %v1440 = vtanh.pop %v1274
        %v1441 = vtanh.pop %v1385
        %v1442 = vtanh.pop %v1387
        %v1443 = vtanh.pop %v1052
        %v1444 = vtanh.pop %v1054
        %v1445 = vtanh.pop %v1165
        %v1446 = vtanh.pop %v1167
        %v1447 = vtanh.pop %v1278
        %v1448 = vtanh.pop %v1280
        %v1449 = vtanh.pop %v1391
        %v1450 = vtanh.pop %v1393
        %v1451 = vtanh.pop %v1058
        %v1452 = vtanh.pop %v1060
        %v1453 = vtanh.pop %v1171
        %v1454 = vtanh.pop %v1173
        %v1455 = vtanh.pop %v1284
        %v1456 = vtanh.pop %v1286
        %v1457 = vtanh.pop %v1397
        %v1458 = vtanh.pop %v1399
        %v1459 = vtanh.pop %v1064
        %v1460 = vtanh.pop %v1066
        %v1461 = vtanh.pop %v1177
        %v1462 = vtanh.pop %v1179
        %v1463 = vtanh.pop %v1290
        %v1464 = vtanh.pop %v1292
        %v1465 = vtanh.pop %v1403
        %v1466 = vtanh.pop %v1405
        %v1467 = vtanh.pop %v1070
        %v1468 = vtanh.pop %v1072
        %v1469 = vtanh.pop %v1183
        %v1470 = vtanh.pop %v1185
        %v1471 = vtanh.pop %v1296
        %v1472 = vtanh.pop %v1298
        %v1473 = vtanh.pop %v1409
        %v1474 = vtanh.pop %v1411
        %v1475 = vtanh.pop %v1076
        %v1476 = vtanh.pop %v1078
        %v1477 = vtanh.pop %v1189
        %v1478 = vtanh.pop %v1191
        %v1479 = vtanh.pop %v1302
        %v1480 = vtanh.pop %v1304
        %v1481 = vtanh.pop %v1415
        %v1482 = vtanh.pop %v1417
        %v1483 = vld [vmem:[%s4] sm:$0xff]
        %v1484 = vld [vmem:[%s4 + $0x8] sm:$0xff]
        %v1485 = vld [vmem:[%s4 + $0x10] sm:$0xff]
        %v1486 = vld [vmem:[%s4 + $0x18] sm:$0xff]
        %v1487 = vld [vmem:[%s4 + $0x20] sm:$0xff]
        %v1488 = vld [vmem:[%s4 + $0x28] sm:$0xff]
        %v1489 = vld [vmem:[%s4 + $0x30] sm:$0xff]
        %v1490 = vld [vmem:[%s4 + $0x38] sm:$0xff]
        %v1491 = vld [vmem:[%s5] sm:$0xff]
        %v1492 = vld [vmem:[%s5 + $0x8] sm:$0xff]
        %v1493 = vld [vmem:[%s5 + $0x10] sm:$0xff]
        %v1494 = vld [vmem:[%s5 + $0x18] sm:$0xff]
        %v1495 = vld [vmem:[%s5 + $0x20] sm:$0xff]
        %v1496 = vld [vmem:[%s5 + $0x28] sm:$0xff]
        %v1497 = vld [vmem:[%s5 + $0x30] sm:$0xff]
        %v1498 = vld [vmem:[%s5 + $0x38] sm:$0xff]
        %1500 = vset.pattern.permute.xlu0 0
        %1501 = vperm.xlu0 %1500, %v1491
        %v1502 = vpop.permute.xlu0 %1501
        %1505 = vset.pattern.permute.xlu0 0
        %1506 = vperm.xlu0 %1505, %v1492
        %v1507 = vpop.permute.xlu0 %1506
        %1510 = vset.pattern.permute.xlu0 0
        %1511 = vperm.xlu0 %1510, %v1493
        %v1512 = vpop.permute.xlu0 %1511
        %1515 = vset.pattern.permute.xlu0 0
        %1516 = vperm.xlu0 %1515, %v1494
        %v1517 = vpop.permute.xlu0 %1516
        %1520 = vset.pattern.permute.xlu0 0
        %1521 = vperm.xlu0 %1520, %v1495
        %v1522 = vpop.permute.xlu0 %1521
        %1525 = vset.pattern.permute.xlu0 0
        %1526 = vperm.xlu0 %1525, %v1496
        %v1527 = vpop.permute.xlu0 %1526
        %1530 = vset.pattern.permute.xlu0 0
        %1531 = vperm.xlu0 %1530, %v1497
        %v1532 = vpop.permute.xlu0 %1531
        %1535 = vset.pattern.permute.xlu0 0
        %1536 = vperm.xlu0 %1535, %v1498
        %v1537 = vpop.permute.xlu0 %1536
        %v1540 = vsel %vm942, %v1483, 0
        %v1543 = vsel %vm942, %v1484, 0
        %v1546 = vsel %vm942, %v1485, 0
        %v1549 = vsel %vm942, %v1486, 0
        %v1552 = vsel %vm942, %v1487, 0
        %v1555 = vsel %vm942, %v1488, 0
        %v1558 = vsel %vm942, %v1489, 0
        %v1561 = vsel %vm942, %v1490, 0
        %1563 = vmatprep.subr.mxu0 %v1420
        %1564 = vmatpush1.msra.mxu0 %v1419
        %1565 = vmatprep.subr.mxu0 %v1428
        %1566 = vmatpush1.msra.mxu0 %v1427
        %1567 = vmatprep.subr.mxu0 %v1436
        %1568 = vmatpush1.msra.mxu0 %v1435
        %1569 = vmatprep.subr.mxu0 %v1444
        %1570 = vmatpush1.msra.mxu0 %v1443
        %1571 = vmatprep.subr.mxu0 %v1452
        %1572 = vmatpush1.msra.mxu0 %v1451
        %1573 = vmatprep.subr.mxu0 %v1460
        %1574 = vmatpush1.msra.mxu0 %v1459
        %1575 = vmatprep.subr.mxu0 %v1468
        %1576 = vmatpush1.msra.mxu0 %v1467
        %1577 = vmatprep.subr.mxu0 %v1476
        %1578 = vmatpush1.msra.mxu0 %v1475
        %1579 = vmatprep.subr.mxu0 0.0
        %1580 = vmatpush1.msra.mxu0 0.0
        %1581 = vmatprep.subr.mxu0 0.0
        %1582 = vmatpush1.msra.mxu0 0.0
        %1583 = vmatprep.subr.mxu0 0.0
        %1584 = vmatpush1.msra.mxu0 0.0
        %1585 = vmatprep.subr.mxu0 0.0
        %1586 = vmatpush1.msra.mxu0 0.0
        %1587 = vmatprep.subr.mxu0 0.0
        %1588 = vmatpush1.msra.mxu0 0.0
        %1589 = vmatprep.subr.mxu0 0.0
        %1590 = vmatpush1.msra.mxu0 0.0
        %1591 = vmatprep.subr.mxu0 0.0
        %1592 = vmatpush1.msra.mxu0 0.0
        %1593 = vmatprep.subr.mxu0 0.0
        %1594 = vmatpush1.msra.mxu0 0.0
        %1595 = vmatprep.subr.mxu0 0.0
        %1596 = vmatpush1.msra.mxu0 0.0
        %1597 = vmatprep.subr.mxu0 0.0
        %1598 = vmatpush1.msra.mxu0 0.0
        %1599 = vmatprep.subr.mxu0 0.0
        %1600 = vmatpush1.msra.mxu0 0.0
        %1601 = vmatprep.subr.mxu0 0.0
        %1602 = vmatpush1.msra.mxu0 0.0
        %1603 = vmatprep.subr.mxu0 0.0
        %1604 = vmatpush1.msra.mxu0 0.0
        %1605 = vmatprep.subr.mxu0 0.0
        %1606 = vmatpush1.msra.mxu0 0.0
        %1607 = vmatprep.subr.mxu0 0.0
        %1608 = vmatpush1.msra.mxu0 0.0
        %1609 = vmatprep.subr.mxu0 0.0
        %1610 = vmatpush1.msra.mxu0 0.0
        %1611 = vmatprep.subr.mxu0 0.0
        %1612 = vmatpush1.msra.mxu0 0.0
        %1613 = vmatprep.subr.mxu0 0.0
        %1614 = vmatpush1.msra.mxu0 0.0
        %1615 = vmatprep.subr.mxu0 0.0
        %1616 = vmatpush1.msra.mxu0 0.0
        %1617 = vmatprep.subr.mxu0 0.0
        %1618 = vmatpush1.msra.mxu0 0.0
        %1619 = vmatprep.subr.mxu0 0.0
        %1620 = vmatpush1.msra.mxu0 0.0
        %1621 = vmatprep.subr.mxu0 0.0
        %1622 = vmatpush1.msra.mxu0 0.0
        %1623 = vmatprep.subr.mxu0 0.0
        %1624 = vmatpush1.msra.mxu0 0.0
        %1625 = vmatprep.subr.mxu0 0.0
        %1626 = vmatpush1.msra.mxu0 0.0
        %1627 = vmatprep.mubr.f32.mxu0 0.0
        %1628 = vmatmul.mubr.f32.gmra.mrb[0].mxu0 %v1540
        %v1629 = vpop.f32.mrb[0].mxu0
        %v1630 = vadd.f32 %v1502, %v1629
        %v1631 = vpop.f32.mrb[0].mxu0
        %v1632 = vadd.f32 %v1502, %v1631
        %1633 = vmatprep.mubr.f32.mxu0 0.0
        %1634 = vmatmul.mubr.f32.gmra.mrb[0].mxu0 %v1543
        %v1635 = vpop.f32.mrb[0].mxu0
        %v1636 = vadd.f32 %v1507, %v1635
        %v1637 = vpop.f32.mrb[0].mxu0
        %v1638 = vadd.f32 %v1507, %v1637
        %1639 = vmatprep.mubr.f32.mxu0 0.0
        %1640 = vmatmul.mubr.f32.gmra.mrb[0].mxu0 %v1546
        %v1641 = vpop.f32.mrb[0].mxu0
        %v1642 = vadd.f32 %v1512, %v1641
        %v1643 = vpop.f32.mrb[0].mxu0
        %v1644 = vadd.f32 %v1512, %v1643
        %1645 = vmatprep.mubr.f32.mxu0 0.0
        %1646 = vmatmul.mubr.f32.gmra.mrb[0].mxu0 %v1549
        %v1647 = vpop.f32.mrb[0].mxu0
        %v1648 = vadd.f32 %v1517, %v1647
        %v1649 = vpop.f32.mrb[0].mxu0
        %v1650 = vadd.f32 %v1517, %v1649
        %1651 = vmatprep.mubr.f32.mxu0 0.0
        %1652 = vmatmul.mubr.f32.gmra.mrb[0].mxu0 %v1552
        %v1653 = vpop.f32.mrb[0].mxu0
        %v1654 = vadd.f32 %v1522, %v1653
        %v1655 = vpop.f32.mrb[0].mxu0
        %v1656 = vadd.f32 %v1522, %v1655
        %1657 = vmatprep.mubr.f32.mxu0 0.0
        %1658 = vmatmul.mubr.f32.gmra.mrb[0].mxu0 %v1555
        %v1659 = vpop.f32.mrb[0].mxu0
        %v1660 = vadd.f32 %v1527, %v1659
        %v1661 = vpop.f32.mrb[0].mxu0
        %v1662 = vadd.f32 %v1527, %v1661
        %1663 = vmatprep.mubr.f32.mxu0 0.0
        %1664 = vmatmul.mubr.f32.gmra.mrb[0].mxu0 %v1558
        %v1665 = vpop.f32.mrb[0].mxu0
        %v1666 = vadd.f32 %v1532, %v1665
        %v1667 = vpop.f32.mrb[0].mxu0
        %v1668 = vadd.f32 %v1532, %v1667
        %1669 = vmatprep.mubr.f32.mxu0 0.0
        %1670 = vmatmul.mubr.f32.gmra.mrb[0].mxu0 %v1561
        %v1671 = vpop.f32.mrb[0].mxu0
        %v1672 = vadd.f32 %v1537, %v1671
        %v1673 = vpop.f32.mrb[0].mxu0
        %v1674 = vadd.f32 %v1537, %v1673
        %1675 = vdwg.mxu0
        %1676 = vmatprep.subr.mxu0 %v1422
        %1677 = vmatpush1.msra.mxu0 %v1421
        %1678 = vmatprep.subr.mxu0 %v1430
        %1679 = vmatpush1.msra.mxu0 %v1429
        %1680 = vmatprep.subr.mxu0 %v1438
        %1681 = vmatpush1.msra.mxu0 %v1437
        %1682 = vmatprep.subr.mxu0 %v1446
        %1683 = vmatpush1.msra.mxu0 %v1445
        %1684 = vmatprep.subr.mxu0 %v1454
        %1685 = vmatpush1.msra.mxu0 %v1453
        %1686 = vmatprep.subr.mxu0 %v1462
        %1687 = vmatpush1.msra.mxu0 %v1461
        %1688 = vmatprep.subr.mxu0 %v1470
        %1689 = vmatpush1.msra.mxu0 %v1469
        %1690 = vmatprep.subr.mxu0 %v1478
        %1691 = vmatpush1.msra.mxu0 %v1477
        %1692 = vmatprep.subr.mxu0 0.0
        %1693 = vmatpush1.msra.mxu0 0.0
        %1694 = vmatprep.subr.mxu0 0.0
        %1695 = vmatpush1.msra.mxu0 0.0
        %1696 = vmatprep.subr.mxu0 0.0
        %1697 = vmatpush1.msra.mxu0 0.0
        %1698 = vmatprep.subr.mxu0 0.0
        %1699 = vmatpush1.msra.mxu0 0.0
        %1700 = vmatprep.subr.mxu0 0.0
        %1701 = vmatpush1.msra.mxu0 0.0
        %1702 = vmatprep.subr.mxu0 0.0
        %1703 = vmatpush1.msra.mxu0 0.0
        %1704 = vmatprep.subr.mxu0 0.0
        %1705 = vmatpush1.msra.mxu0 0.0
        %1706 = vmatprep.subr.mxu0 0.0
        %1707 = vmatpush1.msra.mxu0 0.0
        %1708 = vmatprep.subr.mxu0 0.0
        %1709 = vmatpush1.msra.mxu0 0.0
        %1710 = vmatprep.subr.mxu0 0.0
        %1711 = vmatpush1.msra.mxu0 0.0
        %1712 = vmatprep.subr.mxu0 0.0
        %1713 = vmatpush1.msra.mxu0 0.0
        %1714 = vmatprep.subr.mxu0 0.0
        %1715 = vmatpush1.msra.mxu0 0.0
        %1716 = vmatprep.subr.mxu0 0.0
        %1717 = vmatpush1.msra.mxu0 0.0
        %1718 = vmatprep.subr.mxu0 0.0
        %1719 = vmatpush1.msra.mxu0 0.0
        %1720 = vmatprep.subr.mxu0 0.0
        %1721 = vmatpush1.msra.mxu0 0.0
        %1722 = vmatprep.subr.mxu0 0.0
        %1723 = vmatpush1.msra.mxu0 0.0
        %1724 = vmatprep.subr.mxu0 0.0
        %1725 = vmatpush1.msra.mxu0 0.0
        %1726 = vmatprep.subr.mxu0 0.0
        %1727 = vmatpush1.msra.mxu0 0.0
        %1728 = vmatprep.subr.mxu0 0.0
        %1729 = vmatpush1.msra.mxu0 0.0
        %1730 = vmatprep.subr.mxu0 0.0
        %1731 = vmatpush1.msra.mxu0 0.0
        %1732 = vmatprep.subr.mxu0 0.0
        %1733 = vmatpush1.msra.mxu0 0.0
        %1734 = vmatprep.subr.mxu0 0.0
        %1735 = vmatpush1.msra.mxu0 0.0
        %1736 = vmatprep.subr.mxu0 0.0
        %1737 = vmatpush1.msra.mxu0 0.0
        %1738 = vmatprep.subr.mxu0 0.0
        %1739 = vmatpush1.msra.mxu0 0.0
        %1740 = vmatprep.mubr.f32.mxu0 0.0
        %1741 = vmatmul.mubr.f32.gmra.mrb[0].mxu0 %v1540
        %v1742 = vpop.f32.mrb[0].mxu0
        %v1743 = vadd.f32 %v1502, %v1742
        %v1744 = vpop.f32.mrb[0].mxu0
        %v1745 = vadd.f32 %v1502, %v1744
        %1746 = vmatprep.mubr.f32.mxu0 0.0
        %1747 = vmatmul.mubr.f32.gmra.mrb[0].mxu0 %v1543
        %v1748 = vpop.f32.mrb[0].mxu0
        %v1749 = vadd.f32 %v1507, %v1748
        %v1750 = vpop.f32.mrb[0].mxu0
        %v1751 = vadd.f32 %v1507, %v1750
        %1752 = vmatprep.mubr.f32.mxu0 0.0
        %1753 = vmatmul.mubr.f32.gmra.mrb[0].mxu0 %v1546
        %v1754 = vpop.f32.mrb[0].mxu0
        %v1755 = vadd.f32 %v1512, %v1754
        %v1756 = vpop.f32.mrb[0].mxu0
        %v1757 = vadd.f32 %v1512, %v1756
        %1758 = vmatprep.mubr.f32.mxu0 0.0
        %1759 = vmatmul.mubr.f32.gmra.mrb[0].mxu0 %v1549
        %v1760 = vpop.f32.mrb[0].mxu0
        %v1761 = vadd.f32 %v1517, %v1760
        %v1762 = vpop.f32.mrb[0].mxu0
        %v1763 = vadd.f32 %v1517, %v1762
        %1764 = vmatprep.mubr.f32.mxu0 0.0
        %1765 = vmatmul.mubr.f32.gmra.mrb[0].mxu0 %v1552
        %v1766 = vpop.f32.mrb[0].mxu0
        %v1767 = vadd.f32 %v1522, %v1766
        %v1768 = vpop.f32.mrb[0].mxu0
        %v1769 = vadd.f32 %v1522, %v1768
        %1770 = vmatprep.mubr.f32.mxu0 0.0
        %1771 = vmatmul.mubr.f32.gmra.mrb[0].mxu0 %v1555
        %v1772 = vpop.f32.mrb[0].mxu0
        %v1773 = vadd.f32 %v1527, %v1772
        %v1774 = vpop.f32.mrb[0].mxu0
        %v1775 = vadd.f32 %v1527, %v1774
        %1776 = vmatprep.mubr.f32.mxu0 0.0
        %1777 = vmatmul.mubr.f32.gmra.mrb[0].mxu0 %v1558
        %v1778 = vpop.f32.mrb[0].mxu0
        %v1779 = vadd.f32 %v1532, %v1778
        %v1780 = vpop.f32.mrb[0].mxu0
        %v1781 = vadd.f32 %v1532, %v1780
        %1782 = vmatprep.mubr.f32.mxu0 0.0
        %1783 = vmatmul.mubr.f32.gmra.mrb[0].mxu0 %v1561
        %v1784 = vpop.f32.mrb[0].mxu0
        %v1785 = vadd.f32 %v1537, %v1784
        %v1786 = vpop.f32.mrb[0].mxu0
        %v1787 = vadd.f32 %v1537, %v1786
        %1788 = vdwg.mxu0
        %1789 = vmatprep.subr.mxu0 %v1424
        %1790 = vmatpush1.msra.mxu0 %v1423
        %1791 = vmatprep.subr.mxu0 %v1432
        %1792 = vmatpush1.msra.mxu0 %v1431
        %1793 = vmatprep.subr.mxu0 %v1440
        %1794 = vmatpush1.msra.mxu0 %v1439
        %1795 = vmatprep.subr.mxu0 %v1448
        %1796 = vmatpush1.msra.mxu0 %v1447
        %1797 = vmatprep.subr.mxu0 %v1456
        %1798 = vmatpush1.msra.mxu0 %v1455
        %1799 = vmatprep.subr.mxu0 %v1464
        %1800 = vmatpush1.msra.mxu0 %v1463
        %1801 = vmatprep.subr.mxu0 %v1472
        %1802 = vmatpush1.msra.mxu0 %v1471
        %1803 = vmatprep.subr.mxu0 %v1480
        %1804 = vmatpush1.msra.mxu0 %v1479
        %1805 = vmatprep.subr.mxu0 0.0
        %1806 = vmatpush1.msra.mxu0 0.0
        %1807 = vmatprep.subr.mxu0 0.0
        %1808 = vmatpush1.msra.mxu0 0.0
        %1809 = vmatprep.subr.mxu0 0.0
        %1810 = vmatpush1.msra.mxu0 0.0
        %1811 = vmatprep.subr.mxu0 0.0
        %1812 = vmatpush1.msra.mxu0 0.0
        %1813 = vmatprep.subr.mxu0 0.0
        %1814 = vmatpush1.msra.mxu0 0.0
        %1815 = vmatprep.subr.mxu0 0.0
        %1816 = vmatpush1.msra.mxu0 0.0
        %1817 = vmatprep.subr.mxu0 0.0
        %1818 = vmatpush1.msra.mxu0 0.0
        %1819 = vmatprep.subr.mxu0 0.0
        %1820 = vmatpush1.msra.mxu0 0.0
        %1821 = vmatprep.subr.mxu0 0.0
        %1822 = vmatpush1.msra.mxu0 0.0
        %1823 = vmatprep.subr.mxu0 0.0
        %1824 = vmatpush1.msra.mxu0 0.0
        %1825 = vmatprep.subr.mxu0 0.0
        %1826 = vmatpush1.msra.mxu0 0.0
        %1827 = vmatprep.subr.mxu0 0.0
        %1828 = vmatpush1.msra.mxu0 0.0
        %1829 = vmatprep.subr.mxu0 0.0
        %1830 = vmatpush1.msra.mxu0 0.0
        %1831 = vmatprep.subr.mxu0 0.0
        %1832 = vmatpush1.msra.mxu0 0.0
        %1833 = vmatprep.subr.mxu0 0.0
        %1834 = vmatpush1.msra.mxu0 0.0
        %1835 = vmatprep.subr.mxu0 0.0
        %1836 = vmatpush1.msra.mxu0 0.0
        %1837 = vmatprep.subr.mxu0 0.0
        %1838 = vmatpush1.msra.mxu0 0.0
        %1839 = vmatprep.subr.mxu0 0.0
        %1840 = vmatpush1.msra.mxu0 0.0
        %1841 = vmatprep.subr.mxu0 0.0
        %1842 = vmatpush1.msra.mxu0 0.0
        %1843 = vmatprep.subr.mxu0 0.0
        %1844 = vmatpush1.msra.mxu0 0.0
        %1845 = vmatprep.subr.mxu0 0.0
        %1846 = vmatpush1.msra.mxu0 0.0
        %1847 = vmatprep.subr.mxu0 0.0
        %1848 = vmatpush1.msra.mxu0 0.0
        %1849 = vmatprep.subr.mxu0 0.0
        %1850 = vmatpush1.msra.mxu0 0.0
        %1851 = vmatprep.subr.mxu0 0.0
        %1852 = vmatpush1.msra.mxu0 0.0
        %1853 = vmatprep.mubr.f32.mxu0 0.0
        %1854 = vmatmul.mubr.f32.gmra.mrb[0].mxu0 %v1540
        %v1855 = vpop.f32.mrb[0].mxu0
        %v1856 = vadd.f32 %v1502, %v1855
        %v1857 = vpop.f32.mrb[0].mxu0
        %v1858 = vadd.f32 %v1502, %v1857
        %1859 = vmatprep.mubr.f32.mxu0 0.0
        %1860 = vmatmul.mubr.f32.gmra.mrb[0].mxu0 %v1543
        %v1861 = vpop.f32.mrb[0].mxu0
        %v1862 = vadd.f32 %v1507, %v1861
        %v1863 = vpop.f32.mrb[0].mxu0
        %v1864 = vadd.f32 %v1507, %v1863
        %1865 = vmatprep.mubr.f32.mxu0 0.0
        %1866 = vmatmul.mubr.f32.gmra.mrb[0].mxu0 %v1546
        %v1867 = vpop.f32.mrb[0].mxu0
        %v1868 = vadd.f32 %v1512, %v1867
        %v1869 = vpop.f32.mrb[0].mxu0
        %v1870 = vadd.f32 %v1512, %v1869
        %1871 = vmatprep.mubr.f32.mxu0 0.0
        %1872 = vmatmul.mubr.f32.gmra.mrb[0].mxu0 %v1549
        %v1873 = vpop.f32.mrb[0].mxu0
        %v1874 = vadd.f32 %v1517, %v1873
        %v1875 = vpop.f32.mrb[0].mxu0
        %v1876 = vadd.f32 %v1517, %v1875
        %1877 = vmatprep.mubr.f32.mxu0 0.0
        %1878 = vmatmul.mubr.f32.gmra.mrb[0].mxu0 %v1552
        %v1879 = vpop.f32.mrb[0].mxu0
        %v1880 = vadd.f32 %v1522, %v1879
        %v1881 = vpop.f32.mrb[0].mxu0
        %v1882 = vadd.f32 %v1522, %v1881
        %1883 = vmatprep.mubr.f32.mxu0 0.0
        %1884 = vmatmul.mubr.f32.gmra.mrb[0].mxu0 %v1555
        %v1885 = vpop.f32.mrb[0].mxu0
        %v1886 = vadd.f32 %v1527, %v1885
        %v1887 = vpop.f32.mrb[0].mxu0
        %v1888 = vadd.f32 %v1527, %v1887
        %1889 = vmatprep.mubr.f32.mxu0 0.0
        %1890 = vmatmul.mubr.f32.gmra.mrb[0].mxu0 %v1558
        %v1891 = vpop.f32.mrb[0].mxu0
        %v1892 = vadd.f32 %v1532, %v1891
        %v1893 = vpop.f32.mrb[0].mxu0
        %v1894 = vadd.f32 %v1532, %v1893
        %1895 = vmatprep.mubr.f32.mxu0 0.0
        %1896 = vmatmul.mubr.f32.gmra.mrb[0].mxu0 %v1561
        %v1897 = vpop.f32.mrb[0].mxu0
        %v1898 = vadd.f32 %v1537, %v1897
        %v1899 = vpop.f32.mrb[0].mxu0
        %v1900 = vadd.f32 %v1537, %v1899
        %1901 = vdwg.mxu0
        %1902 = vmatprep.subr.mxu0 %v1426
        %1903 = vmatpush1.msra.mxu0 %v1425
        %1904 = vmatprep.subr.mxu0 %v1434
        %1905 = vmatpush1.msra.mxu0 %v1433
        %1906 = vmatprep.subr.mxu0 %v1442
        %1907 = vmatpush1.msra.mxu0 %v1441
        %1908 = vmatprep.subr.mxu0 %v1450
        %1909 = vmatpush1.msra.mxu0 %v1449
        %1910 = vmatprep.subr.mxu0 %v1458
        %1911 = vmatpush1.msra.mxu0 %v1457
        %1912 = vmatprep.subr.mxu0 %v1466
        %1913 = vmatpush1.msra.mxu0 %v1465
        %1914 = vmatprep.subr.mxu0 %v1474
        %1915 = vmatpush1.msra.mxu0 %v1473
        %1916 = vmatprep.subr.mxu0 %v1482
        %1917 = vmatpush1.msra.mxu0 %v1481
        %1918 = vmatprep.subr.mxu0 0.0
        %1919 = vmatpush1.msra.mxu0 0.0
        %1920 = vmatprep.subr.mxu0 0.0
        %1921 = vmatpush1.msra.mxu0 0.0
        %1922 = vmatprep.subr.mxu0 0.0
        %1923 = vmatpush1.msra.mxu0 0.0
        %1924 = vmatprep.subr.mxu0 0.0
        %1925 = vmatpush1.msra.mxu0 0.0
        %1926 = vmatprep.subr.mxu0 0.0
        %1927 = vmatpush1.msra.mxu0 0.0
        %1928 = vmatprep.subr.mxu0 0.0
        %1929 = vmatpush1.msra.mxu0 0.0
        %1930 = vmatprep.subr.mxu0 0.0
        %1931 = vmatpush1.msra.mxu0 0.0
        %1932 = vmatprep.subr.mxu0 0.0
        %1933 = vmatpush1.msra.mxu0 0.0
        %1934 = vmatprep.subr.mxu0 0.0
        %1935 = vmatpush1.msra.mxu0 0.0
        %1936 = vmatprep.subr.mxu0 0.0
        %1937 = vmatpush1.msra.mxu0 0.0
        %1938 = vmatprep.subr.mxu0 0.0
        %1939 = vmatpush1.msra.mxu0 0.0
        %1940 = vmatprep.subr.mxu0 0.0
        %1941 = vmatpush1.msra.mxu0 0.0
        %1942 = vmatprep.subr.mxu0 0.0
        %1943 = vmatpush1.msra.mxu0 0.0
        %1944 = vmatprep.subr.mxu0 0.0
        %1945 = vmatpush1.msra.mxu0 0.0
        %1946 = vmatprep.subr.mxu0 0.0
        %1947 = vmatpush1.msra.mxu0 0.0
        %1948 = vmatprep.subr.mxu0 0.0
        %1949 = vmatpush1.msra.mxu0 0.0
        %1950 = vmatprep.subr.mxu0 0.0
        %1951 = vmatpush1.msra.mxu0 0.0
        %1952 = vmatprep.subr.mxu0 0.0
        %1953 = vmatpush1.msra.mxu0 0.0
        %1954 = vmatprep.subr.mxu0 0.0
        %1955 = vmatpush1.msra.mxu0 0.0
        %1956 = vmatprep.subr.mxu0 0.0
        %1957 = vmatpush1.msra.mxu0 0.0
        %1958 = vmatprep.subr.mxu0 0.0
        %1959 = vmatpush1.msra.mxu0 0.0
        %1960 = vmatprep.subr.mxu0 0.0
        %1961 = vmatpush1.msra.mxu0 0.0
        %1962 = vmatprep.subr.mxu0 0.0
        %1963 = vmatpush1.msra.mxu0 0.0
        %1964 = vmatprep.subr.mxu0 0.0
        %1965 = vmatpush1.msra.mxu0 0.0
        %1966 = vmatprep.mubr.f32.mxu0 0.0
        %1967 = vmatmul.mubr.f32.gmra.mrb[0].mxu0 %v1540
        %v1968 = vpop.f32.mrb[0].mxu0
        %v1969 = vadd.f32 %v1502, %v1968
        %v1970 = vpop.f32.mrb[0].mxu0
        %v1971 = vadd.f32 %v1502, %v1970
        %1972 = vmatprep.mubr.f32.mxu0 0.0
        %1973 = vmatmul.mubr.f32.gmra.mrb[0].mxu0 %v1543
        %v1974 = vpop.f32.mrb[0].mxu0
        %v1975 = vadd.f32 %v1507, %v1974
        %v1976 = vpop.f32.mrb[0].mxu0
        %v1977 = vadd.f32 %v1507, %v1976
        %1978 = vmatprep.mubr.f32.mxu0 0.0
        %1979 = vmatmul.mubr.f32.gmra.mrb[0].mxu0 %v1546
        %v1980 = vpop.f32.mrb[0].mxu0
        %v1981 = vadd.f32 %v1512, %v1980
        %v1982 = vpop.f32.mrb[0].mxu0
        %v1983 = vadd.f32 %v1512, %v1982
        %1984 = vmatprep.mubr.f32.mxu0 0.0
        %1985 = vmatmul.mubr.f32.gmra.mrb[0].mxu0 %v1549
        %v1986 = vpop.f32.mrb[0].mxu0
        %v1987 = vadd.f32 %v1517, %v1986
        %v1988 = vpop.f32.mrb[0].mxu0
        %v1989 = vadd.f32 %v1517, %v1988
        %1990 = vmatprep.mubr.f32.mxu0 0.0
        %1991 = vmatmul.mubr.f32.gmra.mrb[0].mxu0 %v1552
        %v1992 = vpop.f32.mrb[0].mxu0
        %v1993 = vadd.f32 %v1522, %v1992
        %v1994 = vpop.f32.mrb[0].mxu0
        %v1995 = vadd.f32 %v1522, %v1994
        %1996 = vmatprep.mubr.f32.mxu0 0.0
        %1997 = vmatmul.mubr.f32.gmra.mrb[0].mxu0 %v1555
        %v1998 = vpop.f32.mrb[0].mxu0
        %v1999 = vadd.f32 %v1527, %v1998
        %v2000 = vpop.f32.mrb[0].mxu0
        %v2001 = vadd.f32 %v1527, %v2000
        %2002 = vmatprep.mubr.f32.mxu0 0.0
        %2003 = vmatmul.mubr.f32.gmra.mrb[0].mxu0 %v1558
        %v2004 = vpop.f32.mrb[0].mxu0
        %v2005 = vadd.f32 %v1532, %v2004
        %v2006 = vpop.f32.mrb[0].mxu0
        %v2007 = vadd.f32 %v1532, %v2006
        %2008 = vmatprep.mubr.f32.mxu0 0.0
        %2009 = vmatmul.mubr.f32.gmra.mrb[0].mxu0 %v1561
        %v2010 = vpop.f32.mrb[0].mxu0
        %v2011 = vadd.f32 %v1537, %v2010
        %v2012 = vpop.f32.mrb[0].mxu0
        %v2013 = vadd.f32 %v1537, %v2012
        %2014 = vdwg.mxu0
        %v2015 = vtanh.pop %v1630
        %v2016 = vtanh.pop %v1632
        %v2017 = vtanh.pop %v1743
        %v2018 = vtanh.pop %v1745
        %v2019 = vtanh.pop %v1856
        %v2020 = vtanh.pop %v1858
        %v2021 = vtanh.pop %v1969
        %v2022 = vtanh.pop %v1971
        %v2023 = vtanh.pop %v1636
        %v2024 = vtanh.pop %v1638
        %v2025 = vtanh.pop %v1749
        %v2026 = vtanh.pop %v1751
        %v2027 = vtanh.pop %v1862
        %v2028 = vtanh.pop %v1864
        %v2029 = vtanh.pop %v1975
        %v2030 = vtanh.pop %v1977
        %v2031 = vtanh.pop %v1642
        %v2032 = vtanh.pop %v1644
        %v2033 = vtanh.pop %v1755
        %v2034 = vtanh.pop %v1757
        %v2035 = vtanh.pop %v1868
        %v2036 = vtanh.pop %v1870
        %v2037 = vtanh.pop %v1981
        %v2038 = vtanh.pop %v1983
        %v2039 = vtanh.pop %v1648
        %v2040 = vtanh.pop %v1650
        %v2041 = vtanh.pop %v1761
        %v2042 = vtanh.pop %v1763
        %v2043 = vtanh.pop %v1874
        %v2044 = vtanh.pop %v1876
        %v2045 = vtanh.pop %v1987
        %v2046 = vtanh.pop %v1989
        %v2047 = vtanh.pop %v1654
        %v2048 = vtanh.pop %v1656
        %v2049 = vtanh.pop %v1767
        %v2050 = vtanh.pop %v1769
        %v2051 = vtanh.pop %v1880
        %v2052 = vtanh.pop %v1882
        %v2053 = vtanh.pop %v1993
        %v2054 = vtanh.pop %v1995
        %v2055 = vtanh.pop %v1660
        %v2056 = vtanh.pop %v1662
        %v2057 = vtanh.pop %v1773
        %v2058 = vtanh.pop %v1775
        %v2059 = vtanh.pop %v1886
        %v2060 = vtanh.pop %v1888
        %v2061 = vtanh.pop %v1999
        %v2062 = vtanh.pop %v2001
        %v2063 = vtanh.pop %v1666
        %v2064 = vtanh.pop %v1668
        %v2065 = vtanh.pop %v1779
        %v2066 = vtanh.pop %v1781
        %v2067 = vtanh.pop %v1892
        %v2068 = vtanh.pop %v1894
        %v2069 = vtanh.pop %v2005
        %v2070 = vtanh.pop %v2007
        %v2071 = vtanh.pop %v1672
        %v2072 = vtanh.pop %v1674
        %v2073 = vtanh.pop %v1785
        %v2074 = vtanh.pop %v1787
        %v2075 = vtanh.pop %v1898
        %v2076 = vtanh.pop %v1900
        %v2077 = vtanh.pop %v2011
        %v2078 = vtanh.pop %v2013
        %v2079 = vld [vmem:[%s6] sm:$0x1]
        %s2080 = sld [smem:[#allocation2]]
        %v2081 = vstv %s2080
        %v2083 = vsel %vm942, %v2079, 0
        %2085 = vmatprep.subr.mxu0 %v2016
        %2086 = vmatpush1.msra.mxu0 %v2015
        %2087 = vmatprep.subr.mxu0 %v2024
        %2088 = vmatpush1.msra.mxu0 %v2023
        %2089 = vmatprep.subr.mxu0 %v2032
        %2090 = vmatpush1.msra.mxu0 %v2031
        %2091 = vmatprep.subr.mxu0 %v2040
        %2092 = vmatpush1.msra.mxu0 %v2039
        %2093 = vmatprep.subr.mxu0 %v2048
        %2094 = vmatpush1.msra.mxu0 %v2047
        %2095 = vmatprep.subr.mxu0 %v2056
        %2096 = vmatpush1.msra.mxu0 %v2055
        %2097 = vmatprep.subr.mxu0 %v2064
        %2098 = vmatpush1.msra.mxu0 %v2063
        %2099 = vmatprep.subr.mxu0 %v2072
        %2100 = vmatpush1.msra.mxu0 %v2071
        %2101 = vmatprep.subr.mxu0 0.0
        %2102 = vmatpush1.msra.mxu0 0.0
        %2103 = vmatprep.subr.mxu0 0.0
        %2104 = vmatpush1.msra.mxu0 0.0
        %2105 = vmatprep.subr.mxu0 0.0
        %2106 = vmatpush1.msra.mxu0 0.0
        %2107 = vmatprep.subr.mxu0 0.0
        %2108 = vmatpush1.msra.mxu0 0.0
        %2109 = vmatprep.subr.mxu0 0.0
        %2110 = vmatpush1.msra.mxu0 0.0
        %2111 = vmatprep.subr.mxu0 0.0
        %2112 = vmatpush1.msra.mxu0 0.0
        %2113 = vmatprep.subr.mxu0 0.0
        %2114 = vmatpush1.msra.mxu0 0.0
        %2115 = vmatprep.subr.mxu0 0.0
        %2116 = vmatpush1.msra.mxu0 0.0
        %2117 = vmatprep.subr.mxu0 0.0
        %2118 = vmatpush1.msra.mxu0 0.0
        %2119 = vmatprep.subr.mxu0 0.0
        %2120 = vmatpush1.msra.mxu0 0.0
        %2121 = vmatprep.subr.mxu0 0.0
        %2122 = vmatpush1.msra.mxu0 0.0
        %2123 = vmatprep.subr.mxu0 0.0
        %2124 = vmatpush1.msra.mxu0 0.0
        %2125 = vmatprep.subr.mxu0 0.0
        %2126 = vmatpush1.msra.mxu0 0.0
        %2127 = vmatprep.subr.mxu0 0.0
        %2128 = vmatpush1.msra.mxu0 0.0
        %2129 = vmatprep.subr.mxu0 0.0
        %2130 = vmatpush1.msra.mxu0 0.0
        %2131 = vmatprep.subr.mxu0 0.0
        %2132 = vmatpush1.msra.mxu0 0.0
        %2133 = vmatprep.subr.mxu0 0.0
        %2134 = vmatpush1.msra.mxu0 0.0
        %2135 = vmatprep.subr.mxu0 0.0
        %2136 = vmatpush1.msra.mxu0 0.0
        %2137 = vmatprep.subr.mxu0 0.0
        %2138 = vmatpush1.msra.mxu0 0.0
        %2139 = vmatprep.subr.mxu0 0.0
        %2140 = vmatpush1.msra.mxu0 0.0
        %2141 = vmatprep.subr.mxu0 0.0
        %2142 = vmatpush1.msra.mxu0 0.0
        %2143 = vmatprep.subr.mxu0 0.0
        %2144 = vmatpush1.msra.mxu0 0.0
        %2145 = vmatprep.subr.mxu0 0.0
        %2146 = vmatpush1.msra.mxu0 0.0
        %2147 = vmatprep.subr.mxu0 0.0
        %2148 = vmatpush1.msra.mxu0 0.0
        %2149 = vmatprep.mubr.f32.mxu0 0.0
        %2150 = vmatmul.mubr.f32.gmra.mrb[0].mxu0 %v2083
        %v2151 = vpop.f32.mrb[0].mxu0
        %v2152 = vadd.f32 %v2081, %v2151
        %v2153 = vpop.f32.mrb[0].mxu0
        %v2154 = vadd.f32 %v2081, %v2153
        %2155 = vdwg.mxu0
        %2156 = vmatprep.subr.mxu0 %v2018
        %2157 = vmatpush1.msra.mxu0 %v2017
        %2158 = vmatprep.subr.mxu0 %v2026
        %2159 = vmatpush1.msra.mxu0 %v2025
        %2160 = vmatprep.subr.mxu0 %v2034
        %2161 = vmatpush1.msra.mxu0 %v2033
        %2162 = vmatprep.subr.mxu0 %v2042
        %2163 = vmatpush1.msra.mxu0 %v2041
        %2164 = vmatprep.subr.mxu0 %v2050
        %2165 = vmatpush1.msra.mxu0 %v2049
        %2166 = vmatprep.subr.mxu0 %v2058
        %2167 = vmatpush1.msra.mxu0 %v2057
        %2168 = vmatprep.subr.mxu0 %v2066
        %2169 = vmatpush1.msra.mxu0 %v2065
        %2170 = vmatprep.subr.mxu0 %v2074
        %2171 = vmatpush1.msra.mxu0 %v2073
        %2172 = vmatprep.subr.mxu0 0.0
        %2173 = vmatpush1.msra.mxu0 0.0
        %2174 = vmatprep.subr.mxu0 0.0
        %2175 = vmatpush1.msra.mxu0 0.0
        %2176 = vmatprep.subr.mxu0 0.0
        %2177 = vmatpush1.msra.mxu0 0.0
        %2178 = vmatprep.subr.mxu0 0.0
        %2179 = vmatpush1.msra.mxu0 0.0
        %2180 = vmatprep.subr.mxu0 0.0
        %2181 = vmatpush1.msra.mxu0 0.0
        %2182 = vmatprep.subr.mxu0 0.0
        %2183 = vmatpush1.msra.mxu0 0.0
        %2184 = vmatprep.subr.mxu0 0.0
        %2185 = vmatpush1.msra.mxu0 0.0
        %2186 = vmatprep.subr.mxu0 0.0
        %2187 = vmatpush1.msra.mxu0 0.0
        %2188 = vmatprep.subr.mxu0 0.0
        %2189 = vmatpush1.msra.mxu0 0.0
        %2190 = vmatprep.subr.mxu0 0.0
        %2191 = vmatpush1.msra.mxu0 0.0
        %2192 = vmatprep.subr.mxu0 0.0
        %2193 = vmatpush1.msra.mxu0 0.0
        %2194 = vmatprep.subr.mxu0 0.0
        %2195 = vmatpush1.msra.mxu0 0.0
        %2196 = vmatprep.subr.mxu0 0.0
        %2197 = vmatpush1.msra.mxu0 0.0
        %2198 = vmatprep.subr.mxu0 0.0
        %2199 = vmatpush1.msra.mxu0 0.0
        %2200 = vmatprep.subr.mxu0 0.0
        %2201 = vmatpush1.msra.mxu0 0.0
        %2202 = vmatprep.subr.mxu0 0.0
        %2203 = vmatpush1.msra.mxu0 0.0
        %2204 = vmatprep.subr.mxu0 0.0
        %2205 = vmatpush1.msra.mxu0 0.0
        %2206 = vmatprep.subr.mxu0 0.0
        %2207 = vmatpush1.msra.mxu0 0.0
        %2208 = vmatprep.subr.mxu0 0.0
        %2209 = vmatpush1.msra.mxu0 0.0
        %2210 = vmatprep.subr.mxu0 0.0
        %2211 = vmatpush1.msra.mxu0 0.0
        %2212 = vmatprep.subr.mxu0 0.0
        %2213 = vmatpush1.msra.mxu0 0.0
        %2214 = vmatprep.subr.mxu0 0.0
        %2215 = vmatpush1.msra.mxu0 0.0
        %2216 = vmatprep.subr.mxu0 0.0
        %2217 = vmatpush1.msra.mxu0 0.0
        %2218 = vmatprep.subr.mxu0 0.0
        %2219 = vmatpush1.msra.mxu0 0.0
        %2220 = vmatprep.mubr.f32.mxu0 0.0
        %2221 = vmatmul.mubr.f32.gmra.mrb[0].mxu0 %v2083
        %v2222 = vpop.f32.mrb[0].mxu0
        %v2223 = vadd.f32 %v2081, %v2222
        %v2224 = vpop.f32.mrb[0].mxu0
        %v2225 = vadd.f32 %v2081, %v2224
        %2226 = vdwg.mxu0
        %2227 = vmatprep.subr.mxu0 %v2020
        %2228 = vmatpush1.msra.mxu0 %v2019
        %2229 = vmatprep.subr.mxu0 %v2028
        %2230 = vmatpush1.msra.mxu0 %v2027
        %2231 = vmatprep.subr.mxu0 %v2036
        %2232 = vmatpush1.msra.mxu0 %v2035
        %2233 = vmatprep.subr.mxu0 %v2044
        %2234 = vmatpush1.msra.mxu0 %v2043
        %2235 = vmatprep.subr.mxu0 %v2052
        %2236 = vmatpush1.msra.mxu0 %v2051
        %2237 = vmatprep.subr.mxu0 %v2060
        %2238 = vmatpush1.msra.mxu0 %v2059
        %2239 = vmatprep.subr.mxu0 %v2068
        %2240 = vmatpush1.msra.mxu0 %v2067
        %2241 = vmatprep.subr.mxu0 %v2076
        %2242 = vmatpush1.msra.mxu0 %v2075
        %2243 = vmatprep.subr.mxu0 0.0
        %2244 = vmatpush1.msra.mxu0 0.0
        %2245 = vmatprep.subr.mxu0 0.0
        %2246 = vmatpush1.msra.mxu0 0.0
        %2247 = vmatprep.subr.mxu0 0.0
        %2248 = vmatpush1.msra.mxu0 0.0
        %2249 = vmatprep.subr.mxu0 0.0
        %2250 = vmatpush1.msra.mxu0 0.0
        %2251 = vmatprep.subr.mxu0 0.0
        %2252 = vmatpush1.msra.mxu0 0.0
        %2253 = vmatprep.subr.mxu0 0.0
        %2254 = vmatpush1.msra.mxu0 0.0
        %2255 = vmatprep.subr.mxu0 0.0
        %2256 = vmatpush1.msra.mxu0 0.0
        %2257 = vmatprep.subr.mxu0 0.0
        %2258 = vmatpush1.msra.mxu0 0.0
        %2259 = vmatprep.subr.mxu0 0.0
        %2260 = vmatpush1.msra.mxu0 0.0
        %2261 = vmatprep.subr.mxu0 0.0
        %2262 = vmatpush1.msra.mxu0 0.0
        %2263 = vmatprep.subr.mxu0 0.0
        %2264 = vmatpush1.msra.mxu0 0.0
        %2265 = vmatprep.subr.mxu0 0.0
        %2266 = vmatpush1.msra.mxu0 0.0
        %2267 = vmatprep.subr.mxu0 0.0
        %2268 = vmatpush1.msra.mxu0 0.0
        %2269 = vmatprep.subr.mxu0 0.0
        %2270 = vmatpush1.msra.mxu0 0.0
        %2271 = vmatprep.subr.mxu0 0.0
        %2272 = vmatpush1.msra.mxu0 0.0
        %2273 = vmatprep.subr.mxu0 0.0
        %2274 = vmatpush1.msra.mxu0 0.0
        %2275 = vmatprep.subr.mxu0 0.0
        %2276 = vmatpush1.msra.mxu0 0.0
        %2277 = vmatprep.subr.mxu0 0.0
        %2278 = vmatpush1.msra.mxu0 0.0
        %2279 = vmatprep.subr.mxu0 0.0
        %2280 = vmatpush1.msra.mxu0 0.0
        %2281 = vmatprep.subr.mxu0 0.0
        %2282 = vmatpush1.msra.mxu0 0.0
        %2283 = vmatprep.subr.mxu0 0.0
        %2284 = vmatpush1.msra.mxu0 0.0
        %2285 = vmatprep.subr.mxu0 0.0
        %2286 = vmatpush1.msra.mxu0 0.0
        %2287 = vmatprep.subr.mxu0 0.0
        %2288 = vmatpush1.msra.mxu0 0.0
        %2289 = vmatprep.subr.mxu0 0.0
        %2290 = vmatpush1.msra.mxu0 0.0
        %2291 = vmatprep.mubr.f32.mxu0 0.0
        %2292 = vmatmul.mubr.f32.gmra.mrb[0].mxu0 %v2083
        %v2293 = vpop.f32.mrb[0].mxu0
        %v2294 = vadd.f32 %v2081, %v2293
        %v2295 = vpop.f32.mrb[0].mxu0
        %v2296 = vadd.f32 %v2081, %v2295
        %2297 = vdwg.mxu0
        %2298 = vmatprep.subr.mxu0 %v2022
        %2299 = vmatpush1.msra.mxu0 %v2021
        %2300 = vmatprep.subr.mxu0 %v2030
        %2301 = vmatpush1.msra.mxu0 %v2029
        %2302 = vmatprep.subr.mxu0 %v2038
        %2303 = vmatpush1.msra.mxu0 %v2037
        %2304 = vmatprep.subr.mxu0 %v2046
        %2305 = vmatpush1.msra.mxu0 %v2045
        %2306 = vmatprep.subr.mxu0 %v2054
        %2307 = vmatpush1.msra.mxu0 %v2053
        %2308 = vmatprep.subr.mxu0 %v2062
        %2309 = vmatpush1.msra.mxu0 %v2061
        %2310 = vmatprep.subr.mxu0 %v2070
        %2311 = vmatpush1.msra.mxu0 %v2069
        %2312 = vmatprep.subr.mxu0 %v2078
        %2313 = vmatpush1.msra.mxu0 %v2077
        %2314 = vmatprep.subr.mxu0 0.0
        %2315 = vmatpush1.msra.mxu0 0.0
        %2316 = vmatprep.subr.mxu0 0.0
        %2317 = vmatpush1.msra.mxu0 0.0
        %2318 = vmatprep.subr.mxu0 0.0
        %2319 = vmatpush1.msra.mxu0 0.0
        %2320 = vmatprep.subr.mxu0 0.0
        %2321 = vmatpush1.msra.mxu0 0.0
        %2322 = vmatprep.subr.mxu0 0.0
        %2323 = vmatpush1.msra.mxu0 0.0
        %2324 = vmatprep.subr.mxu0 0.0
        %2325 = vmatpush1.msra.mxu0 0.0
        %2326 = vmatprep.subr.mxu0 0.0
        %2327 = vmatpush1.msra.mxu0 0.0
        %2328 = vmatprep.subr.mxu0 0.0
        %2329 = vmatpush1.msra.mxu0 0.0
        %2330 = vmatprep.subr.mxu0 0.0
        %2331 = vmatpush1.msra.mxu0 0.0
        %2332 = vmatprep.subr.mxu0 0.0
        %2333 = vmatpush1.msra.mxu0 0.0
        %2334 = vmatprep.subr.mxu0 0.0
        %2335 = vmatpush1.msra.mxu0 0.0
        %2336 = vmatprep.subr.mxu0 0.0
        %2337 = vmatpush1.msra.mxu0 0.0
        %2338 = vmatprep.subr.mxu0 0.0
        %2339 = vmatpush1.msra.mxu0 0.0
        %2340 = vmatprep.subr.mxu0 0.0
        %2341 = vmatpush1.msra.mxu0 0.0
        %2342 = vmatprep.subr.mxu0 0.0
        %2343 = vmatpush1.msra.mxu0 0.0
        %2344 = vmatprep.subr.mxu0 0.0
        %2345 = vmatpush1.msra.mxu0 0.0
        %2346 = vmatprep.subr.mxu0 0.0
        %2347 = vmatpush1.msra.mxu0 0.0
        %2348 = vmatprep.subr.mxu0 0.0
        %2349 = vmatpush1.msra.mxu0 0.0
        %2350 = vmatprep.subr.mxu0 0.0
        %2351 = vmatpush1.msra.mxu0 0.0
        %2352 = vmatprep.subr.mxu0 0.0
        %2353 = vmatpush1.msra.mxu0 0.0
        %2354 = vmatprep.subr.mxu0 0.0
        %2355 = vmatpush1.msra.mxu0 0.0
        %2356 = vmatprep.subr.mxu0 0.0
        %2357 = vmatpush1.msra.mxu0 0.0
        %2358 = vmatprep.subr.mxu0 0.0
        %2359 = vmatpush1.msra.mxu0 0.0
        %2360 = vmatprep.subr.mxu0 0.0
        %2361 = vmatpush1.msra.mxu0 0.0
        %2362 = vmatprep.mubr.f32.mxu0 0.0
        %2363 = vmatmul.mubr.f32.gmra.mrb[0].mxu0 %v2083
        %v2364 = vpop.f32.mrb[0].mxu0
        %v2365 = vadd.f32 %v2081, %v2364
        %v2366 = vpop.f32.mrb[0].mxu0
        %v2367 = vadd.f32 %v2081, %v2366
        %2368 = vdwg.mxu0
        %v2369 = vmul.f32 %v2152, 0.25
        %v2370 = vmul.f32 %v2154, 0.25
        %v2371 = vmul.f32 %v2223, 0.25
        %v2372 = vmul.f32 %v2225, 0.25
        %v2373 = vmul.f32 %v2294, 0.25
        %v2374 = vmul.f32 %v2296, 0.25
        %v2375 = vmul.f32 %v2365, 0.25
        %v2376 = vmul.f32 %v2367, 0.25
        %v2377 = vtanh.pop %v2369
        %v2378 = vtanh.pop %v2370
        %v2379 = vtanh.pop %v2371
        %v2380 = vtanh.pop %v2372
        %v2381 = vtanh.pop %v2373
        %v2382 = vtanh.pop %v2374
        %v2383 = vtanh.pop %v2375
        %v2384 = vtanh.pop %v2376
        %v2385 = vmul.f32 %v2377, 0.5
        %v2386 = vmul.f32 %v2378, 0.5
        %v2387 = vmul.f32 %v2379, 0.5
        %v2388 = vmul.f32 %v2380, 0.5
        %v2389 = vmul.f32 %v2381, 0.5
        %v2390 = vmul.f32 %v2382, 0.5
        %v2391 = vmul.f32 %v2383, 0.5
        %v2392 = vmul.f32 %v2384, 0.5
        %v2393 = vadd.f32 %v2385, 0.5
        %v2394 = vadd.f32 %v2386, 0.5
        %v2395 = vadd.f32 %v2387, 0.5
        %v2396 = vadd.f32 %v2388, 0.5
        %v2397 = vadd.f32 %v2389, 0.5
        %v2398 = vadd.f32 %v2390, 0.5
        %v2399 = vadd.f32 %v2391, 0.5
        %v2400 = vadd.f32 %v2392, 0.5
        %v2401 = vmul.f32 %v2393, 0.00159
        %v2402 = vmul.f32 %v2394, 0.00159
        %v2403 = vmul.f32 %v2395, 0.00159
        %v2404 = vmul.f32 %v2396, 0.00159
        %v2405 = vmul.f32 %v2397, 0.00159
        %v2406 = vmul.f32 %v2398, 0.00159
        %v2407 = vmul.f32 %v2399, 0.00159
        %v2408 = vmul.f32 %v2400, 0.00159
        %v2417 = vcombine.low %v2401, %v2402
        %v2418 = vcombine.low %v2403, %v2404
        %v2419 = vcombine.low %v2405, %v2406
        %v2420 = vcombine.low %v2407, %v2408
        %v2422 = vunpack.c.l.s4 1966171168
        %v2423 = vunpack.c.0.s8 %v2422
        %v2424 = vlaneseq
        %v2425 = vshrl.u32 %v2424, 7
        %v2426 = vsub.s32 %v2423, %v2425
        %v2427 = vrot.slane %v2417, %v2426
        %v2429 = vunpack.c.l.s4 1966171168
        %v2430 = vunpack.c.0.s8 %v2429
        %v2431 = vlaneseq
        %v2432 = vshrl.u32 %v2431, 7
        %v2433 = vsub.s32 %v2430, %v2432
        %v2434 = vrot.slane %v2418, %v2433
        %v2436 = vunpack.c.l.s4 1966171168
        %v2437 = vunpack.c.0.s8 %v2436
        %v2438 = vlaneseq
        %v2439 = vshrl.u32 %v2438, 7
        %v2440 = vsub.s32 %v2437, %v2439
        %v2441 = vrot.slane %v2419, %v2440
        %v2443 = vunpack.c.l.s4 1966171168
        %v2444 = vunpack.c.0.s8 %v2443
        %v2445 = vlaneseq
        %v2446 = vshrl.u32 %v2445, 7
        %v2447 = vsub.s32 %v2444, %v2446
        %v2448 = vrot.slane %v2420, %v2447
        %v2449 = vcombine.low %v2427, %v2434
        %v2450 = vcombine.low %v2441, %v2448
        %v2452 = vunpack.c.l.s4 1966171168
        %v2453 = vunpack.c.0.s8 %v2452
        %v2454 = vlaneseq
        %v2455 = vshrl.u32 %v2454, 7
        %v2456 = vsub.s32 %v2453, %v2455
        %v2457 = vrot.slane %v2449, %v2456
        %v2459 = vunpack.c.l.s4 1966171168
        %v2460 = vunpack.c.0.s8 %v2459
        %v2461 = vlaneseq
        %v2462 = vshrl.u32 %v2461, 7
        %v2463 = vsub.s32 %v2460, %v2462
        %v2464 = vrot.slane %v2450, %v2463
        %v2465 = vcombine.low %v2457, %v2464
        %2467 = vst [vmem:[%s300] sm:$0xff] %v2465
        %s2468 = sand.u32 %s204, 1
        %s2469 = scalar_lea.sflag [#allocation4], %s2468
        %s2470 = sand.u32 %s204, 1
        %s2471 = smul.addr %s2470, 8
        %s2472 = scalar_lea.vmem [#allocation3], %s2471
        // Predicated region
        $region53: #{tpu_custom_call.1} parent=51 // pred_check
          %p2473 = pneg %p214
        $region54: #{tpu_custom_call.1} parent=51 // pred_check_branch
          %2475 = sbr.rel (%p2473) target = $region56
        $region55: #{tpu_custom_call.1} parent=51 // pred_region
          %s2476 = smul.u32 8, %s23
          %s2478 = ssub.s32 128, 128
          %2479 = vsyncadd %s2469, %s2478
          %s2480 = smul.addr %s2476, 16
          %s2481 = scalar_lea.hbm %s8, %s2480
          %s2483 = sshll.u32 %s2472, 4
          %s2484 = int_to_ptr.vmem [resolvable:$true] %s2483
          %2486 = dma.vmem_to_hbm [thread:$0]  %s2484, 128, %s2481, %s2469
        $region56: #{tpu_custom_call.1} parent=51 // pred_fallthru
          _
      $region52: #{tpu_custom_call.1} parent=5 // pred_fallthru
        _
      %p2487 = scmp.le.s32.totalorder 2, %s18
      // Predicated region
      $region57: #{tpu_custom_call.1} parent=5 // pred_check
        %p2488 = pneg %p2487
      $region58: #{tpu_custom_call.1} parent=5 // pred_check_branch
        %2490 = sbr.rel (%p2488) target = $region60
      $region59: #{tpu_custom_call.1} parent=5 // pred_region
        %s2491 = ssub.s32 %s18, 2
        // Predicated region
        $region61: #{tpu_custom_call.1} parent=59 // pred_check
          %p2492 = pneg %p220
        $region62: #{tpu_custom_call.1} parent=59 // pred_check_branch
          %2494 = sbr.rel (%p2492) target = $region64
        $region63: #{tpu_custom_call.1} parent=59 // pred_region
          %s2495 = sand.u32 %s205, 1
          %s2496 = scalar_lea.sflag [#allocation4], %s2495
          %s2497 = sand.u32 %s205, 1
          %s2498 = smul.addr %s2497, 8
          %s2499 = scalar_lea.vmem [#allocation3], %s2498
          %2500 = dma.done %s2496, 128
        $region64: #{tpu_custom_call.1} parent=59 // pred_fallthru
          _
      $region60: #{tpu_custom_call.1} parent=5 // pred_fallthru
        _
    $region6: #{tpu_custom_call.1} parent=1 // loop_footer
      %s22 = sadd.s32 1, %s18
    $region7: #{tpu_custom_call.1} parent=1 // loop_footer_branch
      %17 = sbr.rel target = $region3
    $region8: #{tpu_custom_call.1} parent=1 // loop_exit
      _
    %2501 = vsyncpa [#allocation4], 1
    %s2502 = scalar_lea.sflag [#allocation4], 1
    %2503 = vsyncpa %s2502, 1

</llo_original>
